<compile_context>
chip_gen: v7x
topology: tpu7x:2x2x1
jax: 0.10.0
libtpu: 0.0.40
codegen_flags: <defaults>
</compile_context>

<pallas_src>
import functools

import jax
import jax.numpy as jnp
import numpy as np
from jax.experimental import pallas as pl
from jax.experimental.pallas import tpu as pltpu

CAPACIDAD = 5
ACCIONES = 4
INPUT_DIM = ACCIONES + 1
HIDDEN = 64
HEAD_PAD = 128        # fused [pop | stack | queue] head padded to a full lane block
SUBLANE = 8


def pilas_colas_kernel(x_ref, wih_ref, whh_ref, b_ref, headw_ref, headb_ref,
                       out_ref, xproj_ref, hs_ref, *, seq_len):
    # x_ref:     (T*BP, D)    time-major rows, batch padded to BP (multiple of 8)
    # wih_ref:   (D, 4H)      input-projection weights (g columns pre-scaled by 2)
    # whh_ref:   (H, 4H)      recurrent weights (g columns pre-scaled by 2)
    # b_ref:     (1, 4H)      fused b_ih + b_hh (g section pre-scaled by 2)
    # headw_ref: (H, 128)     [pop_w | stack_w | queue_w | zeros]
    # headb_ref: (1, 128)     [pop_b | stack_b | queue_b | zeros]
    # out_ref:   (T*BP, 128)  relu of fused heads, lane-dense
    # xproj_ref: (T*BP, 4H)   VMEM scratch for the hoisted input projection
    # hs_ref:    (T*BP, H)    VMEM scratch for the per-step hidden states
    T = seq_len
    BP = x_ref.shape[0] // T
    H = whh_ref.shape[0]

    # One-off input projection + fused bias, parked in VMEM scratch so it does
    # not stay live in vregs across the whole unrolled recurrence.
    xproj_ref[...] = (jnp.dot(x_ref[...], wih_ref[...],
                              preferred_element_type=jnp.float32)
                      + b_ref[...])

    # Serial recurrence, fully unrolled (T static). h/c are small (BP, H)
    # value carries; the RHS weight is streamed from the VMEM ref per step.
    h = jnp.zeros((BP, H), jnp.float32)
    c = jnp.zeros((BP, H), jnp.float32)
    for t in range(T):
        z = xproj_ref[t * BP:(t + 1) * BP, :] + jnp.dot(
            h, whh_ref[...], preferred_element_type=jnp.float32)   # (BP, 4H)
        # One bulk sigmoid over all four gate blocks (PyTorch order i, f, g, o).
        # g-gate pre-activation was pre-scaled by 2 in the wrapper, so
        # tanh(gate_g) = 2*sigmoid(2*gate_g) - 1 is recovered with one fma.
        s = jax.nn.sigmoid(z)
        i_g = s[:, 0 * H:1 * H]
        f_g = s[:, 1 * H:2 * H]
        g_g = 2.0 * s[:, 2 * H:3 * H] - 1.0
        o_g = s[:, 3 * H:4 * H]
        c = f_g * c + i_g * g_g
        h = o_g * jnp.tanh(c)
        hs_ref[t * BP:(t + 1) * BP, :] = h

    # Fused heads over all timesteps' hidden states: one lane-dense matmul,
    # one relu, one unmasked full-lane store. (stack/queue columns are only
    # consumed for the last time block; the extra rows are negligible.)
    heads = jnp.dot(hs_ref[...], headw_ref[...],
                    preferred_element_type=jnp.float32) + headb_ref[...]
    out_ref[...] = jnp.maximum(heads, 0.0)


@jax.jit
def pilas_colas_forward(x, params):
    B, T, D = x.shape
    H, C = HIDDEN, CAPACIDAD
    BP = ((B + SUBLANE - 1) // SUBLANE) * SUBLANE

    # (B, T, D) -> time-major, batch padded to sublane width, flattened rows.
    x_tm = jnp.transpose(x.astype(jnp.float32), (1, 0, 2))           # (T, B, D)
    x_tm = jnp.pad(x_tm, ((0, 0), (0, BP - B), (0, 0)))              # (T, BP, D)
    x_flat = x_tm.reshape(T * BP, D)                                 # (T*BP, D)

    f32 = lambda a: a.astype(jnp.float32)
    wih = f32(params["w_ih"]).T                                      # (D, 4H)
    whh = f32(params["w_hh"]).T                                      # (H, 4H)
    b = f32(params["b_ih"] + params["b_hh"])[None, :]                # (1, 4H)

    # Pre-scale the g-gate columns/bias by 2 so the kernel can use a single
    # bulk sigmoid and recover tanh(x) = 2*sigmoid(2x) - 1.
    gscale = jnp.concatenate([jnp.ones((2 * H,), jnp.float32),
                              jnp.full((H,), 2.0, jnp.float32),
                              jnp.ones((H,), jnp.float32)])[None, :]  # (1, 4H)
    wih = wih * gscale
    whh = whh * gscale
    b = b * gscale

    # Fused, lane-dense head: [pop | stack | queue | zero-pad] -> 128 cols.
    headw = jnp.concatenate([f32(params["pop_w"]).T,
                             f32(params["stack_w"]).T,
                             f32(params["queue_w"]).T], axis=1)       # (H, 1+2C)
    headw = jnp.pad(headw, ((0, 0), (0, HEAD_PAD - headw.shape[1])))  # (H, 128)
    headb = jnp.concatenate([f32(params["pop_b"]),
                             f32(params["stack_b"]),
                             f32(params["queue_b"])])[None, :]        # (1, 1+2C)
    headb = jnp.pad(headb, ((0, 0), (0, HEAD_PAD - headb.shape[1])))  # (1, 128)

    vmem_spec = pl.BlockSpec(memory_space=pltpu.MemorySpace.VMEM)
    flops = (2 * T * BP * D * 4 * H            # input projection
             + 2 * T * BP * H * 4 * H          # recurrence
             + 2 * T * BP * H * HEAD_PAD)      # fused heads
    transcendentals = T * BP * (4 * H + H)     # bulk sigmoid + tanh(c) per step
    bytes_accessed = 4 * (x_flat.size + wih.size + whh.size + b.size
                          + headw.size + headb.size + T * BP * HEAD_PAD)

    out = pl.pallas_call(
        functools.partial(pilas_colas_kernel, seq_len=T),
        out_shape=jax.ShapeDtypeStruct((T * BP, HEAD_PAD), jnp.float32),
        in_specs=[vmem_spec] * 6,
        out_specs=vmem_spec,
        scratch_shapes=[pltpu.VMEM((T * BP, 4 * H), jnp.float32),
                        pltpu.VMEM((T * BP, H), jnp.float32)],
        cost_estimate=pl.CostEstimate(flops=flops,
                                      transcendentals=transcendentals,
                                      bytes_accessed=bytes_accessed),
    )(x_flat, wih, whh, b, headw, headb)

    pop_out = out[:, 0].reshape(T, BP)[:, :B].T                       # (B, T)
    last = (T - 1) * BP
    stack_out = out[last:last + B, 1:1 + C]                           # (B, C)
    queue_out = out[last:last + B, 1 + C:1 + 2 * C]                   # (B, C)
    return pop_out, stack_out, queue_out


def init_params(key, input_size=INPUT_DIM, hidden=HIDDEN, cap=CAPACIDAD):
    """Deterministic init mimicking PyTorch default uniform(-1/sqrt(fan), 1/sqrt(fan))."""
    ks = jax.random.split(key, 10)
    k_lstm = 1.0 / np.sqrt(hidden)
    k_fc = 1.0 / np.sqrt(hidden)
    u = lambda k, shape, bound: jax.random.uniform(
        k, shape, jnp.float32, minval=-bound, maxval=bound)
    return {
        "w_ih": u(ks[0], (4 * hidden, input_size), k_lstm),
        "w_hh": u(ks[1], (4 * hidden, hidden), k_lstm),
        "b_ih": u(ks[2], (4 * hidden,), k_lstm),
        "b_hh": u(ks[3], (4 * hidden,), k_lstm),
        "pop_w": u(ks[4], (1, hidden), k_fc),
        "pop_b": u(ks[5], (1,), k_fc),
        "stack_w": u(ks[6], (cap, hidden), k_fc),
        "stack_b": u(ks[7], (cap,), k_fc),
        "queue_w": u(ks[8], (cap, hidden), k_fc),
        "queue_b": u(ks[9], (cap,), k_fc),
    }


def reference_forward(x, params):
    """Pure-JAX reference matching torch.nn.LSTM + heads (unscaled params)."""
    w_ih, w_hh = params["w_ih"], params["w_hh"]
    b_ih, b_hh = params["b_ih"], params["b_hh"]
    B, T, _ = x.shape
    H = w_hh.shape[1]
    h = jnp.zeros((B, H), jnp.float32)
    c = jnp.zeros((B, H), jnp.float32)
    outs = []
    for t in range(T):
        g = x[:, t] @ w_ih.T + b_ih + h @ w_hh.T + b_hh
        i, f, gg, o = jnp.split(g, 4, axis=-1)
        i = jax.nn.sigmoid(i)
        f = jax.nn.sigmoid(f)
        gg = jnp.tanh(gg)
        o = jax.nn.sigmoid(o)
        c = f * c + i * gg
        h = o * jnp.tanh(c)
        outs.append(h)
    out = jnp.stack(outs, axis=1)                                     # (B, T, H)
    pop = jax.nn.relu(out @ params["pop_w"].T + params["pop_b"])[..., 0]
    stack = jax.nn.relu(out[:, -1] @ params["stack_w"].T + params["stack_b"])
    queue = jax.nn.relu(out[:, -1] @ params["queue_w"].T + params["queue_b"])
    return pop, stack, queue


if __name__ == "__main__":
    key = jax.random.PRNGKey(0)
    k_x, k_p = jax.random.split(key)

    B, T, D = 2, 8, INPUT_DIM
    x = jax.random.normal(k_x, (B, T, D), dtype=jnp.float32)
    params = init_params(k_p)

    pop_out, stack_out, queue_out = jax.block_until_ready(
        pilas_colas_forward(x, params))

    pop_r, stack_r, queue_r = reference_forward(x, params)
    assert pop_out.shape == (B, T)
    assert stack_out.shape == (B, CAPACIDAD)
    assert queue_out.shape == (B, CAPACIDAD)
    np.testing.assert_allclose(np.asarray(pop_out), np.asarray(pop_r),
                               rtol=5e-3, atol=5e-3)
    np.testing.assert_allclose(np.asarray(stack_out), np.asarray(stack_r),
                               rtol=5e-3, atol=5e-3)
    np.testing.assert_allclose(np.asarray(queue_out), np.asarray(queue_r),
                               rtol=5e-3, atol=5e-3)

    print("KERNEL_OK")
</pallas_src>

<mosaic_0001>
module attributes {stable_mosaic.version = 11 : i64} {
  func.func @pilas_colas_kernel(%arg0: memref<64x5xf32, #tpu.memory_space<vmem>>, %arg1: memref<5x256xf32, #tpu.memory_space<vmem>>, %arg2: memref<64x256xf32, #tpu.memory_space<vmem>>, %arg3: memref<1x256xf32, #tpu.memory_space<vmem>>, %arg4: memref<64x128xf32, #tpu.memory_space<vmem>>, %arg5: memref<1x128xf32, #tpu.memory_space<vmem>>, %arg6: memref<64x128xf32, #tpu.memory_space<vmem>>, %arg7: memref<64x256xf32, #tpu.memory_space<vmem>>, %arg8: memref<64x64xf32, #tpu.memory_space<vmem>>) attributes {dimension_semantics = [], scalar_prefetch = 0 : i64, scratch_operands = 2 : i64, tpu.core_type = #tpu.core_type<tc>} {
    %c0 = arith.constant 0 : index
    %c0_0 = arith.constant 0 : index
    %0 = vector.load %arg0[%c0, %c0_0] : memref<64x5xf32, #tpu.memory_space<vmem>>, vector<64x5xf32>
    %c0_1 = arith.constant 0 : index
    %c0_2 = arith.constant 0 : index
    %1 = vector.load %arg1[%c0_1, %c0_2] : memref<5x256xf32, #tpu.memory_space<vmem>>, vector<5x256xf32>
    %cst = arith.constant dense<0.000000e+00> : vector<64x256xf32>
    %2 = tpu.matmul %0, %1, %cst {dimension_numbers = #tpu.dot_dimension_numbers<[1], [0], [0], [1], [0, 0, 1, 1], [], []>} : vector<64x5xf32>, vector<5x256xf32>, vector<64x256xf32> -> vector<64x256xf32>
    %c0_3 = arith.constant 0 : index
    %c0_4 = arith.constant 0 : index
    %3 = vector.load %arg3[%c0_3, %c0_4] : memref<1x256xf32, #tpu.memory_space<vmem>>, vector<1x256xf32>
    %4 = vector.broadcast %3 : vector<1x256xf32> to vector<64x256xf32>
    %5 = arith.addf %2, %4 : vector<64x256xf32>
    %c0_5 = arith.constant 0 : index
    %c0_6 = arith.constant 0 : index
    %6 = vector.load %arg7[%c0_5, %c0_6] : memref<64x256xf32, #tpu.memory_space<vmem>>, vector<64x256xf32>
    tpu.vector_store %arg7[%c0_5, %c0_6], %5 {strides = array<i32>} : memref<64x256xf32, #tpu.memory_space<vmem>>, vector<64x256xf32>,
    %cst_7 = arith.constant 0.000000e+00 : f32
    %7 = vector.broadcast %cst_7 : f32 to vector<8x64xf32>
    %cst_8 = arith.constant 0.000000e+00 : f32
    %8 = vector.broadcast %cst_8 : f32 to vector<8x64xf32>
    %c0_9 = arith.constant 0 : index
    %c0_10 = arith.constant 0 : index
    %9 = vector.load %arg7[%c0_9, %c0_10] : memref<64x256xf32, #tpu.memory_space<vmem>>, vector<8x256xf32>
    %c0_11 = arith.constant 0 : index
    %c0_12 = arith.constant 0 : index
    %10 = vector.load %arg2[%c0_11, %c0_12] : memref<64x256xf32, #tpu.memory_space<vmem>>, vector<64x256xf32>
    %cst_13 = arith.constant dense<0.000000e+00> : vector<8x256xf32>
    %11 = tpu.matmul %7, %10, %cst_13 {dimension_numbers = #tpu.dot_dimension_numbers<[1], [0], [0], [1], [0, 0, 1, 1], [], []>} : vector<8x64xf32>, vector<64x256xf32>, vector<8x256xf32> -> vector<8x256xf32>
    %12 = arith.addf %9, %11 : vector<8x256xf32>
    %13 = arith.negf %12 : vector<8x256xf32>
    %14 = math.exp %13 : vector<8x256xf32>
    %cst_14 = arith.constant 1.000000e+00 : f32
    %15 = vector.broadcast %cst_14 : f32 to vector<8x256xf32>
    %16 = arith.addf %15, %14 : vector<8x256xf32>
    %17 = arith.divf %15, %16 : vector<8x256xf32>
    %18 = vector.extract_strided_slice %17 {offsets = [0, 0], sizes = [8, 64], strides = [1, 1]} : vector<8x256xf32> to vector<8x64xf32>
    %19 = vector.extract_strided_slice %17 {offsets = [0, 64], sizes = [8, 64], strides = [1, 1]} : vector<8x256xf32> to vector<8x64xf32>
    %20 = vector.extract_strided_slice %17 {offsets = [0, 128], sizes = [8, 64], strides = [1, 1]} : vector<8x256xf32> to vector<8x64xf32>
    %cst_15 = arith.constant 2.000000e+00 : f32
    %21 = vector.broadcast %cst_15 : f32 to vector<8x64xf32>
    %22 = arith.mulf %21, %20 : vector<8x64xf32>
    %cst_16 = arith.constant 1.000000e+00 : f32
    %23 = vector.broadcast %cst_16 : f32 to vector<8x64xf32>
    %24 = arith.subf %22, %23 : vector<8x64xf32>
    %25 = vector.extract_strided_slice %17 {offsets = [0, 192], sizes = [8, 64], strides = [1, 1]} : vector<8x256xf32> to vector<8x64xf32>
    %26 = arith.mulf %19, %8 : vector<8x64xf32>
    %27 = arith.mulf %18, %24 : vector<8x64xf32>
    %28 = arith.addf %26, %27 : vector<8x64xf32>
    %29 = math.tanh %28 : vector<8x64xf32>
    %30 = arith.mulf %25, %29 : vector<8x64xf32>
    %c0_17 = arith.constant 0 : index
    %c0_18 = arith.constant 0 : index
    %31 = vector.load %arg8[%c0_17, %c0_18] : memref<64x64xf32, #tpu.memory_space<vmem>>, vector<8x64xf32>
    tpu.vector_store %arg8[%c0_17, %c0_18], %30 {strides = array<i32>} : memref<64x64xf32, #tpu.memory_space<vmem>>, vector<8x64xf32>,
    %c8 = arith.constant 8 : index
    %c0_19 = arith.constant 0 : index
    %32 = vector.load %arg7[%c8, %c0_19] : memref<64x256xf32, #tpu.memory_space<vmem>>, vector<8x256xf32>
    %c0_20 = arith.constant 0 : index
    %c0_21 = arith.constant 0 : index
    %33 = vector.load %arg2[%c0_20, %c0_21] : memref<64x256xf32, #tpu.memory_space<vmem>>, vector<64x256xf32>
    %cst_22 = arith.constant dense<0.000000e+00> : vector<8x256xf32>
    %34 = tpu.matmul %30, %33, %cst_22 {dimension_numbers = #tpu.dot_dimension_numbers<[1], [0], [0], [1], [0, 0, 1, 1], [], []>} : vector<8x64xf32>, vector<64x256xf32>, vector<8x256xf32> -> vector<8x256xf32>
    %35 = arith.addf %32, %34 : vector<8x256xf32>
    %36 = arith.negf %35 : vector<8x256xf32>
    %37 = math.exp %36 : vector<8x256xf32>
    %cst_23 = arith.constant 1.000000e+00 : f32
    %38 = vector.broadcast %cst_23 : f32 to vector<8x256xf32>
    %39 = arith.addf %38, %37 : vector<8x256xf32>
    %40 = arith.divf %38, %39 : vector<8x256xf32>
    %41 = vector.extract_strided_slice %40 {offsets = [0, 0], sizes = [8, 64], strides = [1, 1]} : vector<8x256xf32> to vector<8x64xf32>
    %42 = vector.extract_strided_slice %40 {offsets = [0, 64], sizes = [8, 64], strides = [1, 1]} : vector<8x256xf32> to vector<8x64xf32>
    %43 = vector.extract_strided_slice %40 {offsets = [0, 128], sizes = [8, 64], strides = [1, 1]} : vector<8x256xf32> to vector<8x64xf32>
    %cst_24 = arith.constant 2.000000e+00 : f32
    %44 = vector.broadcast %cst_24 : f32 to vector<8x64xf32>
    %45 = arith.mulf %44, %43 : vector<8x64xf32>
    %cst_25 = arith.constant 1.000000e+00 : f32
    %46 = vector.broadcast %cst_25 : f32 to vector<8x64xf32>
    %47 = arith.subf %45, %46 : vector<8x64xf32>
    %48 = vector.extract_strided_slice %40 {offsets = [0, 192], sizes = [8, 64], strides = [1, 1]} : vector<8x256xf32> to vector<8x64xf32>
    %49 = arith.mulf %42, %28 : vector<8x64xf32>
    %50 = arith.mulf %41, %47 : vector<8x64xf32>
    %51 = arith.addf %49, %50 : vector<8x64xf32>
    %52 = math.tanh %51 : vector<8x64xf32>
    %53 = arith.mulf %48, %52 : vector<8x64xf32>
    %c8_26 = arith.constant 8 : index
    %c0_27 = arith.constant 0 : index
    %54 = vector.load %arg8[%c8_26, %c0_27] : memref<64x64xf32, #tpu.memory_space<vmem>>, vector<8x64xf32>
    tpu.vector_store %arg8[%c8_26, %c0_27], %53 {strides = array<i32>} : memref<64x64xf32, #tpu.memory_space<vmem>>, vector<8x64xf32>,
    %c16 = arith.constant 16 : index
    %c0_28 = arith.constant 0 : index
    %55 = vector.load %arg7[%c16, %c0_28] : memref<64x256xf32, #tpu.memory_space<vmem>>, vector<8x256xf32>
    %c0_29 = arith.constant 0 : index
    %c0_30 = arith.constant 0 : index
    %56 = vector.load %arg2[%c0_29, %c0_30] : memref<64x256xf32, #tpu.memory_space<vmem>>, vector<64x256xf32>
    %cst_31 = arith.constant dense<0.000000e+00> : vector<8x256xf32>
    %57 = tpu.matmul %53, %56, %cst_31 {dimension_numbers = #tpu.dot_dimension_numbers<[1], [0], [0], [1], [0, 0, 1, 1], [], []>} : vector<8x64xf32>, vector<64x256xf32>, vector<8x256xf32> -> vector<8x256xf32>
    %58 = arith.addf %55, %57 : vector<8x256xf32>
    %59 = arith.negf %58 : vector<8x256xf32>
    %60 = math.exp %59 : vector<8x256xf32>
    %cst_32 = arith.constant 1.000000e+00 : f32
    %61 = vector.broadcast %cst_32 : f32 to vector<8x256xf32>
    %62 = arith.addf %61, %60 : vector<8x256xf32>
    %63 = arith.divf %61, %62 : vector<8x256xf32>
    %64 = vector.extract_strided_slice %63 {offsets = [0, 0], sizes = [8, 64], strides = [1, 1]} : vector<8x256xf32> to vector<8x64xf32>
    %65 = vector.extract_strided_slice %63 {offsets = [0, 64], sizes = [8, 64], strides = [1, 1]} : vector<8x256xf32> to vector<8x64xf32>
    %66 = vector.extract_strided_slice %63 {offsets = [0, 128], sizes = [8, 64], strides = [1, 1]} : vector<8x256xf32> to vector<8x64xf32>
    %cst_33 = arith.constant 2.000000e+00 : f32
    %67 = vector.broadcast %cst_33 : f32 to vector<8x64xf32>
    %68 = arith.mulf %67, %66 : vector<8x64xf32>
    %cst_34 = arith.constant 1.000000e+00 : f32
    %69 = vector.broadcast %cst_34 : f32 to vector<8x64xf32>
    %70 = arith.subf %68, %69 : vector<8x64xf32>
    %71 = vector.extract_strided_slice %63 {offsets = [0, 192], sizes = [8, 64], strides = [1, 1]} : vector<8x256xf32> to vector<8x64xf32>
    %72 = arith.mulf %65, %51 : vector<8x64xf32>
    %73 = arith.mulf %64, %70 : vector<8x64xf32>
    %74 = arith.addf %72, %73 : vector<8x64xf32>
    %75 = math.tanh %74 : vector<8x64xf32>
    %76 = arith.mulf %71, %75 : vector<8x64xf32>
    %c16_35 = arith.constant 16 : index
    %c0_36 = arith.constant 0 : index
    %77 = vector.load %arg8[%c16_35, %c0_36] : memref<64x64xf32, #tpu.memory_space<vmem>>, vector<8x64xf32>
    tpu.vector_store %arg8[%c16_35, %c0_36], %76 {strides = array<i32>} : memref<64x64xf32, #tpu.memory_space<vmem>>, vector<8x64xf32>,
    %c24 = arith.constant 24 : index
    %c0_37 = arith.constant 0 : index
    %78 = vector.load %arg7[%c24, %c0_37] : memref<64x256xf32, #tpu.memory_space<vmem>>, vector<8x256xf32>
    %c0_38 = arith.constant 0 : index
    %c0_39 = arith.constant 0 : index
    %79 = vector.load %arg2[%c0_38, %c0_39] : memref<64x256xf32, #tpu.memory_space<vmem>>, vector<64x256xf32>
    %cst_40 = arith.constant dense<0.000000e+00> : vector<8x256xf32>
    %80 = tpu.matmul %76, %79, %cst_40 {dimension_numbers = #tpu.dot_dimension_numbers<[1], [0], [0], [1], [0, 0, 1, 1], [], []>} : vector<8x64xf32>, vector<64x256xf32>, vector<8x256xf32> -> vector<8x256xf32>
    %81 = arith.addf %78, %80 : vector<8x256xf32>
    %82 = arith.negf %81 : vector<8x256xf32>
    %83 = math.exp %82 : vector<8x256xf32>
    %cst_41 = arith.constant 1.000000e+00 : f32
    %84 = vector.broadcast %cst_41 : f32 to vector<8x256xf32>
    %85 = arith.addf %84, %83 : vector<8x256xf32>
    %86 = arith.divf %84, %85 : vector<8x256xf32>
    %87 = vector.extract_strided_slice %86 {offsets = [0, 0], sizes = [8, 64], strides = [1, 1]} : vector<8x256xf32> to vector<8x64xf32>
    %88 = vector.extract_strided_slice %86 {offsets = [0, 64], sizes = [8, 64], strides = [1, 1]} : vector<8x256xf32> to vector<8x64xf32>
    %89 = vector.extract_strided_slice %86 {offsets = [0, 128], sizes = [8, 64], strides = [1, 1]} : vector<8x256xf32> to vector<8x64xf32>
    %cst_42 = arith.constant 2.000000e+00 : f32
    %90 = vector.broadcast %cst_42 : f32 to vector<8x64xf32>
    %91 = arith.mulf %90, %89 : vector<8x64xf32>
    %cst_43 = arith.constant 1.000000e+00 : f32
    %92 = vector.broadcast %cst_43 : f32 to vector<8x64xf32>
    %93 = arith.subf %91, %92 : vector<8x64xf32>
    %94 = vector.extract_strided_slice %86 {offsets = [0, 192], sizes = [8, 64], strides = [1, 1]} : vector<8x256xf32> to vector<8x64xf32>
    %95 = arith.mulf %88, %74 : vector<8x64xf32>
    %96 = arith.mulf %87, %93 : vector<8x64xf32>
    %97 = arith.addf %95, %96 : vector<8x64xf32>
    %98 = math.tanh %97 : vector<8x64xf32>
    %99 = arith.mulf %94, %98 : vector<8x64xf32>
    %c24_44 = arith.constant 24 : index
    %c0_45 = arith.constant 0 : index
    %100 = vector.load %arg8[%c24_44, %c0_45] : memref<64x64xf32, #tpu.memory_space<vmem>>, vector<8x64xf32>
    tpu.vector_store %arg8[%c24_44, %c0_45], %99 {strides = array<i32>} : memref<64x64xf32, #tpu.memory_space<vmem>>, vector<8x64xf32>,
    %c32 = arith.constant 32 : index
    %c0_46 = arith.constant 0 : index
    %101 = vector.load %arg7[%c32, %c0_46] : memref<64x256xf32, #tpu.memory_space<vmem>>, vector<8x256xf32>
    %c0_47 = arith.constant 0 : index
    %c0_48 = arith.constant 0 : index
    %102 = vector.load %arg2[%c0_47, %c0_48] : memref<64x256xf32, #tpu.memory_space<vmem>>, vector<64x256xf32>
    %cst_49 = arith.constant dense<0.000000e+00> : vector<8x256xf32>
    %103 = tpu.matmul %99, %102, %cst_49 {dimension_numbers = #tpu.dot_dimension_numbers<[1], [0], [0], [1], [0, 0, 1, 1], [], []>} : vector<8x64xf32>, vector<64x256xf32>, vector<8x256xf32> -> vector<8x256xf32>
    %104 = arith.addf %101, %103 : vector<8x256xf32>
    %105 = arith.negf %104 : vector<8x256xf32>
    %106 = math.exp %105 : vector<8x256xf32>
    %cst_50 = arith.constant 1.000000e+00 : f32
    %107 = vector.broadcast %cst_50 : f32 to vector<8x256xf32>
    %108 = arith.addf %107, %106 : vector<8x256xf32>
    %109 = arith.divf %107, %108 : vector<8x256xf32>
    %110 = vector.extract_strided_slice %109 {offsets = [0, 0], sizes = [8, 64], strides = [1, 1]} : vector<8x256xf32> to vector<8x64xf32>
    %111 = vector.extract_strided_slice %109 {offsets = [0, 64], sizes = [8, 64], strides = [1, 1]} : vector<8x256xf32> to vector<8x64xf32>
    %112 = vector.extract_strided_slice %109 {offsets = [0, 128], sizes = [8, 64], strides = [1, 1]} : vector<8x256xf32> to vector<8x64xf32>
    %cst_51 = arith.constant 2.000000e+00 : f32
    %113 = vector.broadcast %cst_51 : f32 to vector<8x64xf32>
    %114 = arith.mulf %113, %112 : vector<8x64xf32>
    %cst_52 = arith.constant 1.000000e+00 : f32
    %115 = vector.broadcast %cst_52 : f32 to vector<8x64xf32>
    %116 = arith.subf %114, %115 : vector<8x64xf32>
    %117 = vector.extract_strided_slice %109 {offsets = [0, 192], sizes = [8, 64], strides = [1, 1]} : vector<8x256xf32> to vector<8x64xf32>
    %118 = arith.mulf %111, %97 : vector<8x64xf32>
    %119 = arith.mulf %110, %116 : vector<8x64xf32>
    %120 = arith.addf %118, %119 : vector<8x64xf32>
    %121 = math.tanh %120 : vector<8x64xf32>
    %122 = arith.mulf %117, %121 : vector<8x64xf32>
    %c32_53 = arith.constant 32 : index
    %c0_54 = arith.constant 0 : index
    %123 = vector.load %arg8[%c32_53, %c0_54] : memref<64x64xf32, #tpu.memory_space<vmem>>, vector<8x64xf32>
    tpu.vector_store %arg8[%c32_53, %c0_54], %122 {strides = array<i32>} : memref<64x64xf32, #tpu.memory_space<vmem>>, vector<8x64xf32>,
    %c40 = arith.constant 40 : index
    %c0_55 = arith.constant 0 : index
    %124 = vector.load %arg7[%c40, %c0_55] : memref<64x256xf32, #tpu.memory_space<vmem>>, vector<8x256xf32>
    %c0_56 = arith.constant 0 : index
    %c0_57 = arith.constant 0 : index
    %125 = vector.load %arg2[%c0_56, %c0_57] : memref<64x256xf32, #tpu.memory_space<vmem>>, vector<64x256xf32>
    %cst_58 = arith.constant dense<0.000000e+00> : vector<8x256xf32>
    %126 = tpu.matmul %122, %125, %cst_58 {dimension_numbers = #tpu.dot_dimension_numbers<[1], [0], [0], [1], [0, 0, 1, 1], [], []>} : vector<8x64xf32>, vector<64x256xf32>, vector<8x256xf32> -> vector<8x256xf32>
    %127 = arith.addf %124, %126 : vector<8x256xf32>
    %128 = arith.negf %127 : vector<8x256xf32>
    %129 = math.exp %128 : vector<8x256xf32>
    %cst_59 = arith.constant 1.000000e+00 : f32
    %130 = vector.broadcast %cst_59 : f32 to vector<8x256xf32>
    %131 = arith.addf %130, %129 : vector<8x256xf32>
    %132 = arith.divf %130, %131 : vector<8x256xf32>
    %133 = vector.extract_strided_slice %132 {offsets = [0, 0], sizes = [8, 64], strides = [1, 1]} : vector<8x256xf32> to vector<8x64xf32>
    %134 = vector.extract_strided_slice %132 {offsets = [0, 64], sizes = [8, 64], strides = [1, 1]} : vector<8x256xf32> to vector<8x64xf32>
    %135 = vector.extract_strided_slice %132 {offsets = [0, 128], sizes = [8, 64], strides = [1, 1]} : vector<8x256xf32> to vector<8x64xf32>
    %cst_60 = arith.constant 2.000000e+00 : f32
    %136 = vector.broadcast %cst_60 : f32 to vector<8x64xf32>
    %137 = arith.mulf %136, %135 : vector<8x64xf32>
    %cst_61 = arith.constant 1.000000e+00 : f32
    %138 = vector.broadcast %cst_61 : f32 to vector<8x64xf32>
    %139 = arith.subf %137, %138 : vector<8x64xf32>
    %140 = vector.extract_strided_slice %132 {offsets = [0, 192], sizes = [8, 64], strides = [1, 1]} : vector<8x256xf32> to vector<8x64xf32>
    %141 = arith.mulf %134, %120 : vector<8x64xf32>
    %142 = arith.mulf %133, %139 : vector<8x64xf32>
    %143 = arith.addf %141, %142 : vector<8x64xf32>
    %144 = math.tanh %143 : vector<8x64xf32>
    %145 = arith.mulf %140, %144 : vector<8x64xf32>
    %c40_62 = arith.constant 40 : index
    %c0_63 = arith.constant 0 : index
    %146 = vector.load %arg8[%c40_62, %c0_63] : memref<64x64xf32, #tpu.memory_space<vmem>>, vector<8x64xf32>
    tpu.vector_store %arg8[%c40_62, %c0_63], %145 {strides = array<i32>} : memref<64x64xf32, #tpu.memory_space<vmem>>, vector<8x64xf32>,
    %c48 = arith.constant 48 : index
    %c0_64 = arith.constant 0 : index
    %147 = vector.load %arg7[%c48, %c0_64] : memref<64x256xf32, #tpu.memory_space<vmem>>, vector<8x256xf32>
    %c0_65 = arith.constant 0 : index
    %c0_66 = arith.constant 0 : index
    %148 = vector.load %arg2[%c0_65, %c0_66] : memref<64x256xf32, #tpu.memory_space<vmem>>, vector<64x256xf32>
    %cst_67 = arith.constant dense<0.000000e+00> : vector<8x256xf32>
    %149 = tpu.matmul %145, %148, %cst_67 {dimension_numbers = #tpu.dot_dimension_numbers<[1], [0], [0], [1], [0, 0, 1, 1], [], []>} : vector<8x64xf32>, vector<64x256xf32>, vector<8x256xf32> -> vector<8x256xf32>
    %150 = arith.addf %147, %149 : vector<8x256xf32>
    %151 = arith.negf %150 : vector<8x256xf32>
    %152 = math.exp %151 : vector<8x256xf32>
    %cst_68 = arith.constant 1.000000e+00 : f32
    %153 = vector.broadcast %cst_68 : f32 to vector<8x256xf32>
    %154 = arith.addf %153, %152 : vector<8x256xf32>
    %155 = arith.divf %153, %154 : vector<8x256xf32>
    %156 = vector.extract_strided_slice %155 {offsets = [0, 0], sizes = [8, 64], strides = [1, 1]} : vector<8x256xf32> to vector<8x64xf32>
    %157 = vector.extract_strided_slice %155 {offsets = [0, 64], sizes = [8, 64], strides = [1, 1]} : vector<8x256xf32> to vector<8x64xf32>
    %158 = vector.extract_strided_slice %155 {offsets = [0, 128], sizes = [8, 64], strides = [1, 1]} : vector<8x256xf32> to vector<8x64xf32>
    %cst_69 = arith.constant 2.000000e+00 : f32
    %159 = vector.broadcast %cst_69 : f32 to vector<8x64xf32>
    %160 = arith.mulf %159, %158 : vector<8x64xf32>
    %cst_70 = arith.constant 1.000000e+00 : f32
    %161 = vector.broadcast %cst_70 : f32 to vector<8x64xf32>
    %162 = arith.subf %160, %161 : vector<8x64xf32>
    %163 = vector.extract_strided_slice %155 {offsets = [0, 192], sizes = [8, 64], strides = [1, 1]} : vector<8x256xf32> to vector<8x64xf32>
    %164 = arith.mulf %157, %143 : vector<8x64xf32>
    %165 = arith.mulf %156, %162 : vector<8x64xf32>
    %166 = arith.addf %164, %165 : vector<8x64xf32>
    %167 = math.tanh %166 : vector<8x64xf32>
    %168 = arith.mulf %163, %167 : vector<8x64xf32>
    %c48_71 = arith.constant 48 : index
    %c0_72 = arith.constant 0 : index
    %169 = vector.load %arg8[%c48_71, %c0_72] : memref<64x64xf32, #tpu.memory_space<vmem>>, vector<8x64xf32>
    tpu.vector_store %arg8[%c48_71, %c0_72], %168 {strides = array<i32>} : memref<64x64xf32, #tpu.memory_space<vmem>>, vector<8x64xf32>,
    %c56 = arith.constant 56 : index
    %c0_73 = arith.constant 0 : index
    %170 = vector.load %arg7[%c56, %c0_73] : memref<64x256xf32, #tpu.memory_space<vmem>>, vector<8x256xf32>
    %c0_74 = arith.constant 0 : index
    %c0_75 = arith.constant 0 : index
    %171 = vector.load %arg2[%c0_74, %c0_75] : memref<64x256xf32, #tpu.memory_space<vmem>>, vector<64x256xf32>
    %cst_76 = arith.constant dense<0.000000e+00> : vector<8x256xf32>
    %172 = tpu.matmul %168, %171, %cst_76 {dimension_numbers = #tpu.dot_dimension_numbers<[1], [0], [0], [1], [0, 0, 1, 1], [], []>} : vector<8x64xf32>, vector<64x256xf32>, vector<8x256xf32> -> vector<8x256xf32>
    %173 = arith.addf %170, %172 : vector<8x256xf32>
    %174 = arith.negf %173 : vector<8x256xf32>
    %175 = math.exp %174 : vector<8x256xf32>
    %cst_77 = arith.constant 1.000000e+00 : f32
    %176 = vector.broadcast %cst_77 : f32 to vector<8x256xf32>
    %177 = arith.addf %176, %175 : vector<8x256xf32>
    %178 = arith.divf %176, %177 : vector<8x256xf32>
    %179 = vector.extract_strided_slice %178 {offsets = [0, 0], sizes = [8, 64], strides = [1, 1]} : vector<8x256xf32> to vector<8x64xf32>
    %180 = vector.extract_strided_slice %178 {offsets = [0, 64], sizes = [8, 64], strides = [1, 1]} : vector<8x256xf32> to vector<8x64xf32>
    %181 = vector.extract_strided_slice %178 {offsets = [0, 128], sizes = [8, 64], strides = [1, 1]} : vector<8x256xf32> to vector<8x64xf32>
    %cst_78 = arith.constant 2.000000e+00 : f32
    %182 = vector.broadcast %cst_78 : f32 to vector<8x64xf32>
    %183 = arith.mulf %182, %181 : vector<8x64xf32>
    %cst_79 = arith.constant 1.000000e+00 : f32
    %184 = vector.broadcast %cst_79 : f32 to vector<8x64xf32>
    %185 = arith.subf %183, %184 : vector<8x64xf32>
    %186 = vector.extract_strided_slice %178 {offsets = [0, 192], sizes = [8, 64], strides = [1, 1]} : vector<8x256xf32> to vector<8x64xf32>
    %187 = arith.mulf %180, %166 : vector<8x64xf32>
    %188 = arith.mulf %179, %185 : vector<8x64xf32>
    %189 = arith.addf %187, %188 : vector<8x64xf32>
    %190 = math.tanh %189 : vector<8x64xf32>
    %191 = arith.mulf %186, %190 : vector<8x64xf32>
    %c56_80 = arith.constant 56 : index
    %c0_81 = arith.constant 0 : index
    %192 = vector.load %arg8[%c56_80, %c0_81] : memref<64x64xf32, #tpu.memory_space<vmem>>, vector<8x64xf32>
    tpu.vector_store %arg8[%c56_80, %c0_81], %191 {strides = array<i32>} : memref<64x64xf32, #tpu.memory_space<vmem>>, vector<8x64xf32>,
    %c0_82 = arith.constant 0 : index
    %c0_83 = arith.constant 0 : index
    %193 = vector.load %arg8[%c0_82, %c0_83] : memref<64x64xf32, #tpu.memory_space<vmem>>, vector<64x64xf32>
    %c0_84 = arith.constant 0 : index
    %c0_85 = arith.constant 0 : index
    %194 = vector.load %arg4[%c0_84, %c0_85] : memref<64x128xf32, #tpu.memory_space<vmem>>, vector<64x128xf32>
    %cst_86 = arith.constant dense<0.000000e+00> : vector<64x128xf32>
    %195 = tpu.matmul %193, %194, %cst_86 {dimension_numbers = #tpu.dot_dimension_numbers<[1], [0], [0], [1], [0, 0, 1, 1], [], []>} : vector<64x64xf32>, vector<64x128xf32>, vector<64x128xf32> -> vector<64x128xf32>
    %c0_87 = arith.constant 0 : index
    %c0_88 = arith.constant 0 : index
    %196 = vector.load %arg5[%c0_87, %c0_88] : memref<1x128xf32, #tpu.memory_space<vmem>>, vector<1x128xf32>
    %197 = vector.broadcast %196 : vector<1x128xf32> to vector<64x128xf32>
    %198 = arith.addf %195, %197 : vector<64x128xf32>
    %cst_89 = arith.constant 0.000000e+00 : f32
    %199 = vector.broadcast %cst_89 : f32 to vector<64x128xf32>
    %200 = arith.maximumf %198, %199 : vector<64x128xf32>
    %c0_90 = arith.constant 0 : index
    %c0_91 = arith.constant 0 : index
    %201 = vector.load %arg6[%c0_90, %c0_91] : memref<64x128xf32, #tpu.memory_space<vmem>>, vector<64x128xf32>
    tpu.vector_store %arg6[%c0_90, %c0_91], %200 {strides = array<i32>} : memref<64x128xf32, #tpu.memory_space<vmem>>, vector<64x128xf32>,
    return
  }
}

</mosaic_0001>

<llo_original>
// kernel: squeeze.1
$region0: #{squeeze.1}
  %s0 = inlined_call_operand.vmem [shape: f32[64], index: 0, kind: input, shape index: {}]
  %s1 = inlined_call_operand.vmem [shape: f32[8,8], index: 1, kind: output, shape index: {}]
  $region1: #{squeeze.1} parent=0
    #allocation0 [shape = 'u8[4096]{0}', space=vmem, size = 0x1000, scoped, tag = 'scoped mem for input reshape']
    %s3 = sshllo.u32 0, 1
    %v4 = vld [vmem:[%s0] sm:%s3]
    %5 = vst [vmem:[#allocation0] sm:%s3] %v4
    %v6 = vld [vmem:[#allocation0] sm:$0x1]
    %vm7 = vcmask 64512
    %8 = vst.msk [vmem:[%s1] sm:$0x1] %vm7, %v6
    %v9 = vld [vmem:[#allocation0] sm:$0x1]
    %10 = vrot.lane.b32.xlu0 %v9, 120
    %v11 = vpop.permute.xlu0 %10
    %vm12 = vcmask 64512
    %s13 = scalar_lea.vmem %s1, 1
    %14 = vst.msk [vmem:[%s13] sm:$0x1] %vm12, %v11
    %v15 = vld [vmem:[#allocation0] sm:$0x1]
    %16 = vrot.lane.b32.xlu0 %v15, 112
    %v17 = vpop.permute.xlu0 %16
    %vm18 = vcmask 64512
    %s19 = scalar_lea.vmem %s1, 2
    %20 = vst.msk [vmem:[%s19] sm:$0x1] %vm18, %v17
    %v21 = vld [vmem:[#allocation0] sm:$0x1]
    %22 = vrot.lane.b32.xlu0 %v21, 104
    %v23 = vpop.permute.xlu0 %22
    %vm24 = vcmask 64512
    %s25 = scalar_lea.vmem %s1, 3
    %26 = vst.msk [vmem:[%s25] sm:$0x1] %vm24, %v23
    %v27 = vld [vmem:[#allocation0] sm:$0x1]
    %28 = vrot.lane.b32.xlu0 %v27, 96
    %v29 = vpop.permute.xlu0 %28
    %vm30 = vcmask 64512
    %s31 = scalar_lea.vmem %s1, 4
    %32 = vst.msk [vmem:[%s31] sm:$0x1] %vm30, %v29
    %v33 = vld [vmem:[#allocation0] sm:$0x1]
    %34 = vrot.lane.b32.xlu0 %v33, 88
    %v35 = vpop.permute.xlu0 %34
    %vm36 = vcmask 64512
    %s37 = scalar_lea.vmem %s1, 5
    %38 = vst.msk [vmem:[%s37] sm:$0x1] %vm36, %v35
    %v39 = vld [vmem:[#allocation0] sm:$0x1]
    %40 = vrot.lane.b32.xlu0 %v39, 80
    %v41 = vpop.permute.xlu0 %40
    %vm42 = vcmask 64512
    %s43 = scalar_lea.vmem %s1, 6
    %44 = vst.msk [vmem:[%s43] sm:$0x1] %vm42, %v41
    %v45 = vld [vmem:[#allocation0] sm:$0x1]
    %46 = vrot.lane.b32.xlu0 %v45, 72
    %v47 = vpop.permute.xlu0 %46
    %vm48 = vcmask 64512
    %s49 = scalar_lea.vmem %s1, 7
    %50 = vst.msk [vmem:[%s49] sm:$0x1] %vm48, %v47

// kernel: pilas_colas_forward.1
$region0: #{pilas_colas_forward.1}
  #allocation0 [shape = 'u32[]', space=smem, size = 0x4, offset = 0x4, fixed_abs, tag = 'smem constant byte address 0x4 - core index']
  #allocation1 [shape = 'u32[144,128]{1,0:T(1,128)}', space=vmem, size = 0x12000, scoped, tag = 'internal scratch']
  #allocation2 [shape = 'f32[64,256]{1,0:T(8,128)}', space=vmem, size = 0x10000, scoped, tag = 'scratch operand']
  #allocation3 [shape = 'f32[64,64]{1,0:T(8,128)}', space=vmem, size = 0x8000, scoped, tag = 'scratch operand']
  %s0 = inlined_call_operand.vmem [shape: f32[64,5], index: 0, kind: input, shape index: {}]
  %s1 = inlined_call_operand.vmem [shape: f32[5,256], index: 1, kind: input, shape index: {}]
  %s2 = inlined_call_operand.vmem [shape: f32[64,256], index: 2, kind: input, shape index: {}]
  %s3 = inlined_call_operand.vmem [shape: f32[1,256], index: 3, kind: input, shape index: {}]
  %s4 = inlined_call_operand.vmem [shape: f32[64,128], index: 4, kind: input, shape index: {}]
  %s5 = inlined_call_operand.vmem [shape: f32[1,128], index: 5, kind: input, shape index: {}]
  %s6 = inlined_call_operand.vmem [shape: f32[64,128], index: 6, kind: output, shape index: {}]
  %s7 = sld [smem:[#allocation0]]
  $region34: #{pilas_colas_forward.1} parent=0
    _
  %s9 = ssub.s32 1, %s7
  %s10 = scalar_select 0, %s9, %s7
  // Predicated region
  $region2: #{pilas_colas_forward.1} parent=0 // pred_check
    _
  $region3: #{pilas_colas_forward.1} parent=0 // pred_check_branch
    %12 = sbr.rel (0) target = $region5
  $region4: #{pilas_colas_forward.1} parent=0 // pred_region
    _
  $region5: #{pilas_colas_forward.1} parent=0 // pred_fallthru
    _
  // Predicated region
  $region6: #{pilas_colas_forward.1} parent=0 // pred_check
    _
  $region7: #{pilas_colas_forward.1} parent=0 // pred_check_branch
    %14 = sbr.rel (0) target = $region9
  $region8: #{pilas_colas_forward.1} parent=0 // pred_region
    _
  $region9: #{pilas_colas_forward.1} parent=0 // pred_fallthru
    _
  // Predicated region
  $region10: #{pilas_colas_forward.1} parent=0 // pred_check
    _
  $region11: #{pilas_colas_forward.1} parent=0 // pred_check_branch
    %16 = sbr.rel (0) target = $region13
  $region12: #{pilas_colas_forward.1} parent=0 // pred_region
    _
  $region13: #{pilas_colas_forward.1} parent=0 // pred_fallthru
    _
  // Predicated region
  $region14: #{pilas_colas_forward.1} parent=0 // pred_check
    _
  $region15: #{pilas_colas_forward.1} parent=0 // pred_check_branch
    %18 = sbr.rel (0) target = $region17
  $region16: #{pilas_colas_forward.1} parent=0 // pred_region
    _
  $region17: #{pilas_colas_forward.1} parent=0 // pred_fallthru
    _
  // Predicated region
  $region18: #{pilas_colas_forward.1} parent=0 // pred_check
    _
  $region19: #{pilas_colas_forward.1} parent=0 // pred_check_branch
    %20 = sbr.rel (0) target = $region21
  $region20: #{pilas_colas_forward.1} parent=0 // pred_region
    _
  $region21: #{pilas_colas_forward.1} parent=0 // pred_fallthru
    _
  // Predicated region
  $region22: #{pilas_colas_forward.1} parent=0 // pred_check
    _
  $region23: #{pilas_colas_forward.1} parent=0 // pred_check_branch
    %22 = sbr.rel (0) target = $region25
  $region24: #{pilas_colas_forward.1} parent=0 // pred_region
    _
  $region25: #{pilas_colas_forward.1} parent=0 // pred_fallthru
    _
  %v23 = vld [vmem:[%s0] sm:$0xff]
  %v24 = vld [vmem:[%s0 + $0x8] sm:$0xff]
  %v25 = vld [vmem:[%s0 + $0x10] sm:$0xff]
  %v26 = vld [vmem:[%s0 + $0x18] sm:$0xff]
  %v27 = vld [vmem:[%s0 + $0x20] sm:$0xff]
  %v28 = vld [vmem:[%s0 + $0x28] sm:$0xff]
  %v29 = vld [vmem:[%s0 + $0x30] sm:$0xff]
  %v30 = vld [vmem:[%s0 + $0x38] sm:$0xff]
  %v31 = vld [vmem:[%s1] sm:$0x1f]
  %v32 = vld [vmem:[%s1 + $0x8] sm:$0x1f]
  %v33 = vld [vmem:[%s3] sm:$0x3]
  %v35 = vlaneseq
  %v36 = vshrl.u32 %v35, 7
  %v37 = vsub.s32 0, %v36
  %v38 = vrot.slane %v33, %v37
  %v39 = vlaneseq
  %v40 = vshrl.u32 %v39, 7
  %v41 = vsub.s32 1, %v40
  %v42 = vrot.slane %v33, %v41
  %vm45 = vcmask 39936
  %v47 = vsel %vm45, %v23, 0
  %v50 = vsel %vm45, %v24, 0
  %v53 = vsel %vm45, %v25, 0
  %v56 = vsel %vm45, %v26, 0
  %v59 = vsel %vm45, %v27, 0
  %v62 = vsel %vm45, %v28, 0
  %v65 = vsel %vm45, %v29, 0
  %v68 = vsel %vm45, %v30, 0
  %vm70 = vcmask 1044480
  %v72 = vsel %vm70, %v31, 0
  %v75 = vsel %vm70, %v32, 0
  %77 = vmatprep.subr.mxu0 %v75
  %78 = vmatpush1.msra.mxu0 %v72
  %79 = vmatprep.subr.mxu0 0.0
  %80 = vmatpush1.msra.mxu0 0.0
  %81 = vmatprep.subr.mxu0 0.0
  %82 = vmatpush1.msra.mxu0 0.0
  %83 = vmatprep.subr.mxu0 0.0
  %84 = vmatpush1.msra.mxu0 0.0
  %85 = vmatprep.subr.mxu0 0.0
  %86 = vmatpush1.msra.mxu0 0.0
  %87 = vmatprep.subr.mxu0 0.0
  %88 = vmatpush1.msra.mxu0 0.0
  %89 = vmatprep.subr.mxu0 0.0
  %90 = vmatpush1.msra.mxu0 0.0
  %91 = vmatprep.subr.mxu0 0.0
  %92 = vmatpush1.msra.mxu0 0.0
  %93 = vmatprep.subr.mxu0 0.0
  %94 = vmatpush1.msra.mxu0 0.0
  %95 = vmatprep.subr.mxu0 0.0
  %96 = vmatpush1.msra.mxu0 0.0
  %97 = vmatprep.subr.mxu0 0.0
  %98 = vmatpush1.msra.mxu0 0.0
  %99 = vmatprep.subr.mxu0 0.0
  %100 = vmatpush1.msra.mxu0 0.0
  %101 = vmatprep.subr.mxu0 0.0
  %102 = vmatpush1.msra.mxu0 0.0
  %103 = vmatprep.subr.mxu0 0.0
  %104 = vmatpush1.msra.mxu0 0.0
  %105 = vmatprep.subr.mxu0 0.0
  %106 = vmatpush1.msra.mxu0 0.0
  %107 = vmatprep.subr.mxu0 0.0
  %108 = vmatpush1.msra.mxu0 0.0
  %109 = vmatprep.subr.mxu0 0.0
  %110 = vmatpush1.msra.mxu0 0.0
  %111 = vmatprep.subr.mxu0 0.0
  %112 = vmatpush1.msra.mxu0 0.0
  %113 = vmatprep.subr.mxu0 0.0
  %114 = vmatpush1.msra.mxu0 0.0
  %115 = vmatprep.subr.mxu0 0.0
  %116 = vmatpush1.msra.mxu0 0.0
  %117 = vmatprep.subr.mxu0 0.0
  %118 = vmatpush1.msra.mxu0 0.0
  %119 = vmatprep.subr.mxu0 0.0
  %120 = vmatpush1.msra.mxu0 0.0
  %121 = vmatprep.subr.mxu0 0.0
  %122 = vmatpush1.msra.mxu0 0.0
  %123 = vmatprep.subr.mxu0 0.0
  %124 = vmatpush1.msra.mxu0 0.0
  %125 = vmatprep.subr.mxu0 0.0
  %126 = vmatpush1.msra.mxu0 0.0
  %127 = vmatprep.subr.mxu0 0.0
  %128 = vmatpush1.msra.mxu0 0.0
  %129 = vmatprep.subr.mxu0 0.0
  %130 = vmatpush1.msra.mxu0 0.0
  %131 = vmatprep.subr.mxu0 0.0
  %132 = vmatpush1.msra.mxu0 0.0
  %133 = vmatprep.subr.mxu0 0.0
  %134 = vmatpush1.msra.mxu0 0.0
  %135 = vmatprep.subr.mxu0 0.0
  %136 = vmatpush1.msra.mxu0 0.0
  %137 = vmatprep.subr.mxu0 0.0
  %138 = vmatpush1.msra.mxu0 0.0
  %139 = vmatprep.subr.mxu0 0.0
  %140 = vmatpush1.msra.mxu0 0.0
  %141 = vmatprep.mubr.f32.mxu0 0.0
  %142 = vmatmul.mubr.f32.gmra.mrb[0].mxu0 %v47
  %v143 = vpop.f32.mrb[0].mxu0
  %v144 = vadd.f32 %v38, %v143
  %v145 = vpop.f32.mrb[0].mxu0
  %v146 = vadd.f32 %v42, %v145
  %147 = vmatprep.mubr.f32.mxu0 0.0
  %148 = vmatmul.mubr.f32.gmra.mrb[0].mxu0 %v50
  %v149 = vpop.f32.mrb[0].mxu0
  %v150 = vadd.f32 %v38, %v149
  %v151 = vpop.f32.mrb[0].mxu0
  %v152 = vadd.f32 %v42, %v151
  %153 = vmatprep.mubr.f32.mxu0 0.0
  %154 = vmatmul.mubr.f32.gmra.mrb[0].mxu0 %v53
  %v155 = vpop.f32.mrb[0].mxu0
  %v156 = vadd.f32 %v38, %v155
  %v157 = vpop.f32.mrb[0].mxu0
  %v158 = vadd.f32 %v42, %v157
  %159 = vmatprep.mubr.f32.mxu0 0.0
  %160 = vmatmul.mubr.f32.gmra.mrb[0].mxu0 %v56
  %v161 = vpop.f32.mrb[0].mxu0
  %v162 = vadd.f32 %v38, %v161
  %v163 = vpop.f32.mrb[0].mxu0
  %v164 = vadd.f32 %v42, %v163
  %165 = vmatprep.mubr.f32.mxu0 0.0
  %166 = vmatmul.mubr.f32.gmra.mrb[0].mxu0 %v59
  %v167 = vpop.f32.mrb[0].mxu0
  %v168 = vadd.f32 %v38, %v167
  %v169 = vpop.f32.mrb[0].mxu0
  %v170 = vadd.f32 %v42, %v169
  %171 = vmatprep.mubr.f32.mxu0 0.0
  %172 = vmatmul.mubr.f32.gmra.mrb[0].mxu0 %v62
  %v173 = vpop.f32.mrb[0].mxu0
  %v174 = vadd.f32 %v38, %v173
  %v175 = vpop.f32.mrb[0].mxu0
  %v176 = vadd.f32 %v42, %v175
  %177 = vmatprep.mubr.f32.mxu0 0.0
  %178 = vmatmul.mubr.f32.gmra.mrb[0].mxu0 %v65
  %v179 = vpop.f32.mrb[0].mxu0
  %v180 = vadd.f32 %v38, %v179
  %v181 = vpop.f32.mrb[0].mxu0
  %v182 = vadd.f32 %v42, %v181
  %183 = vmatprep.mubr.f32.mxu0 0.0
  %184 = vmatmul.mubr.f32.gmra.mrb[0].mxu0 %v68
  %v185 = vpop.f32.mrb[0].mxu0
  %v186 = vadd.f32 %v38, %v185
  %v187 = vpop.f32.mrb[0].mxu0
  %v188 = vadd.f32 %v42, %v187
  %189 = vdwg.mxu0
  %190 = vst [vmem:[#allocation2] sm:$0xff] %v144
  %191 = vst [vmem:[#allocation2 + $0x8] sm:$0xff] %v146
  %192 = vst [vmem:[#allocation2 + $0x10] sm:$0xff] %v150
  %193 = vst [vmem:[#allocation2 + $0x18] sm:$0xff] %v152
  %194 = vst [vmem:[#allocation2 + $0x20] sm:$0xff] %v156
  %195 = vst [vmem:[#allocation2 + $0x28] sm:$0xff] %v158
  %196 = vst [vmem:[#allocation2 + $0x30] sm:$0xff] %v162
  %197 = vst [vmem:[#allocation2 + $0x38] sm:$0xff] %v164
  %198 = vst [vmem:[#allocation2 + $0x40] sm:$0xff] %v168
  %199 = vst [vmem:[#allocation2 + $0x48] sm:$0xff] %v170
  %200 = vst [vmem:[#allocation2 + $0x50] sm:$0xff] %v174
  %201 = vst [vmem:[#allocation2 + $0x58] sm:$0xff] %v176
  %202 = vst [vmem:[#allocation2 + $0x60] sm:$0xff] %v180
  %203 = vst [vmem:[#allocation2 + $0x68] sm:$0xff] %v182
  %204 = vst [vmem:[#allocation2 + $0x70] sm:$0xff] %v186
  %205 = vst [vmem:[#allocation2 + $0x78] sm:$0xff] %v188
  %v206 = vld [vmem:[#allocation2] sm:$0xff]
  %v207 = vld [vmem:[#allocation2 + $0x8] sm:$0xff]
  %v208 = vld [vmem:[%s2] sm:$0xff]
  %v209 = vld [vmem:[%s2 + $0x8] sm:$0xff]
  %v210 = vld [vmem:[%s2 + $0x10] sm:$0xff]
  %v211 = vld [vmem:[%s2 + $0x18] sm:$0xff]
  %v212 = vld [vmem:[%s2 + $0x20] sm:$0xff]
  %v213 = vld [vmem:[%s2 + $0x28] sm:$0xff]
  %v214 = vld [vmem:[%s2 + $0x30] sm:$0xff]
  %v215 = vld [vmem:[%s2 + $0x38] sm:$0xff]
  %v216 = vld [vmem:[%s2 + $0x40] sm:$0xff]
  %v217 = vld [vmem:[%s2 + $0x48] sm:$0xff]
  %v218 = vld [vmem:[%s2 + $0x50] sm:$0xff]
  %v219 = vld [vmem:[%s2 + $0x58] sm:$0xff]
  %v220 = vld [vmem:[%s2 + $0x60] sm:$0xff]
  %v221 = vld [vmem:[%s2 + $0x68] sm:$0xff]
  %v222 = vld [vmem:[%s2 + $0x70] sm:$0xff]
  %v223 = vld [vmem:[%s2 + $0x78] sm:$0xff]
  %vm224 = vcmask 523264
  %v226 = vsel %vm224, 0.0, 0
  %228 = vmatprep.subr.mxu0 %v209
  %229 = vmatpush1.msra.mxu0 %v208
  %230 = vmatprep.subr.mxu0 %v211
  %231 = vmatpush1.msra.mxu0 %v210
  %232 = vmatprep.subr.mxu0 %v213
  %233 = vmatpush1.msra.mxu0 %v212
  %234 = vmatprep.subr.mxu0 %v215
  %235 = vmatpush1.msra.mxu0 %v214
  %236 = vmatprep.subr.mxu0 %v217
  %237 = vmatpush1.msra.mxu0 %v216
  %238 = vmatprep.subr.mxu0 %v219
  %239 = vmatpush1.msra.mxu0 %v218
  %240 = vmatprep.subr.mxu0 %v221
  %241 = vmatpush1.msra.mxu0 %v220
  %242 = vmatprep.subr.mxu0 %v223
  %243 = vmatpush1.msra.mxu0 %v222
  %244 = vmatprep.subr.mxu0 0.0
  %245 = vmatpush1.msra.mxu0 0.0
  %246 = vmatprep.subr.mxu0 0.0
  %247 = vmatpush1.msra.mxu0 0.0
  %248 = vmatprep.subr.mxu0 0.0
  %249 = vmatpush1.msra.mxu0 0.0
  %250 = vmatprep.subr.mxu0 0.0
  %251 = vmatpush1.msra.mxu0 0.0
  %252 = vmatprep.subr.mxu0 0.0
  %253 = vmatpush1.msra.mxu0 0.0
  %254 = vmatprep.subr.mxu0 0.0
  %255 = vmatpush1.msra.mxu0 0.0
  %256 = vmatprep.subr.mxu0 0.0
  %257 = vmatpush1.msra.mxu0 0.0
  %258 = vmatprep.subr.mxu0 0.0
  %259 = vmatpush1.msra.mxu0 0.0
  %260 = vmatprep.subr.mxu0 0.0
  %261 = vmatpush1.msra.mxu0 0.0
  %262 = vmatprep.subr.mxu0 0.0
  %263 = vmatpush1.msra.mxu0 0.0
  %264 = vmatprep.subr.mxu0 0.0
  %265 = vmatpush1.msra.mxu0 0.0
  %266 = vmatprep.subr.mxu0 0.0
  %267 = vmatpush1.msra.mxu0 0.0
  %268 = vmatprep.subr.mxu0 0.0
  %269 = vmatpush1.msra.mxu0 0.0
  %270 = vmatprep.subr.mxu0 0.0
  %271 = vmatpush1.msra.mxu0 0.0
  %272 = vmatprep.subr.mxu0 0.0
  %273 = vmatpush1.msra.mxu0 0.0
  %274 = vmatprep.subr.mxu0 0.0
  %275 = vmatpush1.msra.mxu0 0.0
  %276 = vmatprep.subr.mxu0 0.0
  %277 = vmatpush1.msra.mxu0 0.0
  %278 = vmatprep.subr.mxu0 0.0
  %279 = vmatpush1.msra.mxu0 0.0
  %280 = vmatprep.subr.mxu0 0.0
  %281 = vmatpush1.msra.mxu0 0.0
  %282 = vmatprep.subr.mxu0 0.0
  %283 = vmatpush1.msra.mxu0 0.0
  %284 = vmatprep.subr.mxu0 0.0
  %285 = vmatpush1.msra.mxu0 0.0
  %286 = vmatprep.subr.mxu0 0.0
  %287 = vmatpush1.msra.mxu0 0.0
  %288 = vmatprep.subr.mxu0 0.0
  %289 = vmatpush1.msra.mxu0 0.0
  %290 = vmatprep.subr.mxu0 0.0
  %291 = vmatpush1.msra.mxu0 0.0
  %292 = vmatprep.mubr.f32.mxu0 0.0
  %293 = vmatmul.mubr.f32.gmra.mrb[0].mxu0 %v226
  %v294 = vpop.f32.mrb[0].mxu0
  %v295 = vadd.f32 0.0, %v294
  %v296 = vpop.f32.mrb[0].mxu0
  %v297 = vadd.f32 0.0, %v296
  %298 = vdwg.mxu0
  %v299 = vadd.f32 %v206, %v295
  %v300 = vadd.f32 %v207, %v297
  %v301 = vxor.u32 %v299, 2147483648
  %v302 = vxor.u32 %v300, 2147483648
  %v303 = vmul.f32 %v301, 1.442695
  %v304 = vpow.pop %v303
  %v305 = vmul.f32 %v302, 1.442695
  %v306 = vpow.pop %v305
  %v307 = vadd.f32 %v304, 1.0
  %v308 = vadd.f32 %v306, 1.0
  %v309 = vrcp.pop %v307
  %v310 = vmul.f32 1.0, %v309
  %v311 = vrcp.pop %v308
  %v312 = vmul.f32 1.0, %v311
  %v313 = vmul.f32 %v312, 2.0
  %v314 = vsub.f32 %v313, 1.0
  %v315 = vmul.f32 %v310, 0.0
  %v316 = vmul.f32 %v310, %v314
  %318 = vrot.lane.b32.xlu0 %v316, 64
  %v319 = vpop.permute.xlu0 %318
  %v321 = vadd.f32 %v315, %v319
  %v322 = vtanh.pop %v321
  %v323 = vmul.f32 %v312, %v322
  %325 = vrot.lane.b32.xlu0 %v323, 64
  %v326 = vpop.permute.xlu0 %325
  %328 = vst.msk [vmem:[#allocation3] sm:$0xff] %vm224, %v326
  %v329 = vld [vmem:[#allocation2 + $0x10] sm:$0xff]
  %v330 = vld [vmem:[#allocation2 + $0x18] sm:$0xff]
  %v331 = vld [vmem:[%s2] sm:$0xff]
  %v332 = vld [vmem:[%s2 + $0x8] sm:$0xff]
  %v333 = vld [vmem:[%s2 + $0x10] sm:$0xff]
  %v334 = vld [vmem:[%s2 + $0x18] sm:$0xff]
  %v335 = vld [vmem:[%s2 + $0x20] sm:$0xff]
  %v336 = vld [vmem:[%s2 + $0x28] sm:$0xff]
  %v337 = vld [vmem:[%s2 + $0x30] sm:$0xff]
  %v338 = vld [vmem:[%s2 + $0x38] sm:$0xff]
  %v339 = vld [vmem:[%s2 + $0x40] sm:$0xff]
  %v340 = vld [vmem:[%s2 + $0x48] sm:$0xff]
  %v341 = vld [vmem:[%s2 + $0x50] sm:$0xff]
  %v342 = vld [vmem:[%s2 + $0x58] sm:$0xff]
  %v343 = vld [vmem:[%s2 + $0x60] sm:$0xff]
  %v344 = vld [vmem:[%s2 + $0x68] sm:$0xff]
  %v345 = vld [vmem:[%s2 + $0x70] sm:$0xff]
  %v346 = vld [vmem:[%s2 + $0x78] sm:$0xff]
  %v347 = vsel %vm224, %v326, 0
  %349 = vmatprep.subr.mxu0 %v332
  %350 = vmatpush1.msra.mxu0 %v331
  %351 = vmatprep.subr.mxu0 %v334
  %352 = vmatpush1.msra.mxu0 %v333
  %353 = vmatprep.subr.mxu0 %v336
  %354 = vmatpush1.msra.mxu0 %v335
  %355 = vmatprep.subr.mxu0 %v338
  %356 = vmatpush1.msra.mxu0 %v337
  %357 = vmatprep.subr.mxu0 %v340
  %358 = vmatpush1.msra.mxu0 %v339
  %359 = vmatprep.subr.mxu0 %v342
  %360 = vmatpush1.msra.mxu0 %v341
  %361 = vmatprep.subr.mxu0 %v344
  %362 = vmatpush1.msra.mxu0 %v343
  %363 = vmatprep.subr.mxu0 %v346
  %364 = vmatpush1.msra.mxu0 %v345
  %365 = vmatprep.subr.mxu0 0.0
  %366 = vmatpush1.msra.mxu0 0.0
  %367 = vmatprep.subr.mxu0 0.0
  %368 = vmatpush1.msra.mxu0 0.0
  %369 = vmatprep.subr.mxu0 0.0
  %370 = vmatpush1.msra.mxu0 0.0
  %371 = vmatprep.subr.mxu0 0.0
  %372 = vmatpush1.msra.mxu0 0.0
  %373 = vmatprep.subr.mxu0 0.0
  %374 = vmatpush1.msra.mxu0 0.0
  %375 = vmatprep.subr.mxu0 0.0
  %376 = vmatpush1.msra.mxu0 0.0
  %377 = vmatprep.subr.mxu0 0.0
  %378 = vmatpush1.msra.mxu0 0.0
  %379 = vmatprep.subr.mxu0 0.0
  %380 = vmatpush1.msra.mxu0 0.0
  %381 = vmatprep.subr.mxu0 0.0
  %382 = vmatpush1.msra.mxu0 0.0
  %383 = vmatprep.subr.mxu0 0.0
  %384 = vmatpush1.msra.mxu0 0.0
  %385 = vmatprep.subr.mxu0 0.0
  %386 = vmatpush1.msra.mxu0 0.0
  %387 = vmatprep.subr.mxu0 0.0
  %388 = vmatpush1.msra.mxu0 0.0
  %389 = vmatprep.subr.mxu0 0.0
  %390 = vmatpush1.msra.mxu0 0.0
  %391 = vmatprep.subr.mxu0 0.0
  %392 = vmatpush1.msra.mxu0 0.0
  %393 = vmatprep.subr.mxu0 0.0
  %394 = vmatpush1.msra.mxu0 0.0
  %395 = vmatprep.subr.mxu0 0.0
  %396 = vmatpush1.msra.mxu0 0.0
  %397 = vmatprep.subr.mxu0 0.0
  %398 = vmatpush1.msra.mxu0 0.0
  %399 = vmatprep.subr.mxu0 0.0
  %400 = vmatpush1.msra.mxu0 0.0
  %401 = vmatprep.subr.mxu0 0.0
  %402 = vmatpush1.msra.mxu0 0.0
  %403 = vmatprep.subr.mxu0 0.0
  %404 = vmatpush1.msra.mxu0 0.0
  %405 = vmatprep.subr.mxu0 0.0
  %406 = vmatpush1.msra.mxu0 0.0
  %407 = vmatprep.subr.mxu0 0.0
  %408 = vmatpush1.msra.mxu0 0.0
  %409 = vmatprep.subr.mxu0 0.0
  %410 = vmatpush1.msra.mxu0 0.0
  %411 = vmatprep.subr.mxu0 0.0
  %412 = vmatpush1.msra.mxu0 0.0
  %413 = vmatprep.mubr.f32.mxu0 0.0
  %414 = vmatmul.mubr.f32.gmra.mrb[0].mxu0 %v347
  %v415 = vpop.f32.mrb[0].mxu0
  %v416 = vadd.f32 0.0, %v415
  %v417 = vpop.f32.mrb[0].mxu0
  %v418 = vadd.f32 0.0, %v417
  %419 = vdwg.mxu0
  %v420 = vadd.f32 %v329, %v416
  %v421 = vadd.f32 %v330, %v418
  %v422 = vxor.u32 %v420, 2147483648
  %v423 = vxor.u32 %v421, 2147483648
  %v424 = vmul.f32 %v422, 1.442695
  %v425 = vpow.pop %v424
  %v426 = vmul.f32 %v423, 1.442695
  %v427 = vpow.pop %v426
  %v428 = vadd.f32 %v425, 1.0
  %v429 = vadd.f32 %v427, 1.0
  %v430 = vrcp.pop %v428
  %v431 = vmul.f32 1.0, %v430
  %v432 = vrcp.pop %v429
  %v433 = vmul.f32 1.0, %v432
  %v434 = vmul.f32 %v433, 2.0
  %v435 = vsub.f32 %v434, 1.0
  %v436 = vmul.f32 %v431, %v321
  %v437 = vmul.f32 %v431, %v435
  %439 = vrot.lane.b32.xlu0 %v437, 64
  %v440 = vpop.permute.xlu0 %439
  %v442 = vadd.f32 %v436, %v440
  %v443 = vtanh.pop %v442
  %v444 = vmul.f32 %v433, %v443
  %446 = vrot.lane.b32.xlu0 %v444, 64
  %v447 = vpop.permute.xlu0 %446
  %449 = vst.msk [vmem:[#allocation3 + $0x8] sm:$0xff] %vm224, %v447
  %v450 = vld [vmem:[#allocation2 + $0x20] sm:$0xff]
  %v451 = vld [vmem:[#allocation2 + $0x28] sm:$0xff]
  %v452 = vld [vmem:[%s2] sm:$0xff]
  %v453 = vld [vmem:[%s2 + $0x8] sm:$0xff]
  %v454 = vld [vmem:[%s2 + $0x10] sm:$0xff]
  %v455 = vld [vmem:[%s2 + $0x18] sm:$0xff]
  %v456 = vld [vmem:[%s2 + $0x20] sm:$0xff]
  %v457 = vld [vmem:[%s2 + $0x28] sm:$0xff]
  %v458 = vld [vmem:[%s2 + $0x30] sm:$0xff]
  %v459 = vld [vmem:[%s2 + $0x38] sm:$0xff]
  %v460 = vld [vmem:[%s2 + $0x40] sm:$0xff]
  %v461 = vld [vmem:[%s2 + $0x48] sm:$0xff]
  %v462 = vld [vmem:[%s2 + $0x50] sm:$0xff]
  %v463 = vld [vmem:[%s2 + $0x58] sm:$0xff]
  %v464 = vld [vmem:[%s2 + $0x60] sm:$0xff]
  %v465 = vld [vmem:[%s2 + $0x68] sm:$0xff]
  %v466 = vld [vmem:[%s2 + $0x70] sm:$0xff]
  %v467 = vld [vmem:[%s2 + $0x78] sm:$0xff]
  %v468 = vsel %vm224, %v447, 0
  %470 = vmatprep.subr.mxu0 %v453
  %471 = vmatpush1.msra.mxu0 %v452
  %472 = vmatprep.subr.mxu0 %v455
  %473 = vmatpush1.msra.mxu0 %v454
  %474 = vmatprep.subr.mxu0 %v457
  %475 = vmatpush1.msra.mxu0 %v456
  %476 = vmatprep.subr.mxu0 %v459
  %477 = vmatpush1.msra.mxu0 %v458
  %478 = vmatprep.subr.mxu0 %v461
  %479 = vmatpush1.msra.mxu0 %v460
  %480 = vmatprep.subr.mxu0 %v463
  %481 = vmatpush1.msra.mxu0 %v462
  %482 = vmatprep.subr.mxu0 %v465
  %483 = vmatpush1.msra.mxu0 %v464
  %484 = vmatprep.subr.mxu0 %v467
  %485 = vmatpush1.msra.mxu0 %v466
  %486 = vmatprep.subr.mxu0 0.0
  %487 = vmatpush1.msra.mxu0 0.0
  %488 = vmatprep.subr.mxu0 0.0
  %489 = vmatpush1.msra.mxu0 0.0
  %490 = vmatprep.subr.mxu0 0.0
  %491 = vmatpush1.msra.mxu0 0.0
  %492 = vmatprep.subr.mxu0 0.0
  %493 = vmatpush1.msra.mxu0 0.0
  %494 = vmatprep.subr.mxu0 0.0
  %495 = vmatpush1.msra.mxu0 0.0
  %496 = vmatprep.subr.mxu0 0.0
  %497 = vmatpush1.msra.mxu0 0.0
  %498 = vmatprep.subr.mxu0 0.0
  %499 = vmatpush1.msra.mxu0 0.0
  %500 = vmatprep.subr.mxu0 0.0
  %501 = vmatpush1.msra.mxu0 0.0
  %502 = vmatprep.subr.mxu0 0.0
  %503 = vmatpush1.msra.mxu0 0.0
  %504 = vmatprep.subr.mxu0 0.0
  %505 = vmatpush1.msra.mxu0 0.0
  %506 = vmatprep.subr.mxu0 0.0
  %507 = vmatpush1.msra.mxu0 0.0
  %508 = vmatprep.subr.mxu0 0.0
  %509 = vmatpush1.msra.mxu0 0.0
  %510 = vmatprep.subr.mxu0 0.0
  %511 = vmatpush1.msra.mxu0 0.0
  %512 = vmatprep.subr.mxu0 0.0
  %513 = vmatpush1.msra.mxu0 0.0
  %514 = vmatprep.subr.mxu0 0.0
  %515 = vmatpush1.msra.mxu0 0.0
  %516 = vmatprep.subr.mxu0 0.0
  %517 = vmatpush1.msra.mxu0 0.0
  %518 = vmatprep.subr.mxu0 0.0
  %519 = vmatpush1.msra.mxu0 0.0
  %520 = vmatprep.subr.mxu0 0.0
  %521 = vmatpush1.msra.mxu0 0.0
  %522 = vmatprep.subr.mxu0 0.0
  %523 = vmatpush1.msra.mxu0 0.0
  %524 = vmatprep.subr.mxu0 0.0
  %525 = vmatpush1.msra.mxu0 0.0
  %526 = vmatprep.subr.mxu0 0.0
  %527 = vmatpush1.msra.mxu0 0.0
  %528 = vmatprep.subr.mxu0 0.0
  %529 = vmatpush1.msra.mxu0 0.0
  %530 = vmatprep.subr.mxu0 0.0
  %531 = vmatpush1.msra.mxu0 0.0
  %532 = vmatprep.subr.mxu0 0.0
  %533 = vmatpush1.msra.mxu0 0.0
  %534 = vmatprep.mubr.f32.mxu0 0.0
  %535 = vmatmul.mubr.f32.gmra.mrb[0].mxu0 %v468
  %v536 = vpop.f32.mrb[0].mxu0
  %v537 = vadd.f32 0.0, %v536
  %v538 = vpop.f32.mrb[0].mxu0
  %v539 = vadd.f32 0.0, %v538
  %540 = vdwg.mxu0
  %v541 = vadd.f32 %v450, %v537
  %v542 = vadd.f32 %v451, %v539
  %v543 = vxor.u32 %v541, 2147483648
  %v544 = vxor.u32 %v542, 2147483648
  %v545 = vmul.f32 %v543, 1.442695
  %v546 = vpow.pop %v545
  %v547 = vmul.f32 %v544, 1.442695
  %v548 = vpow.pop %v547
  %v549 = vadd.f32 %v546, 1.0
  %v550 = vadd.f32 %v548, 1.0
  %v551 = vrcp.pop %v549
  %v552 = vmul.f32 1.0, %v551
  %v553 = vrcp.pop %v550
  %v554 = vmul.f32 1.0, %v553
  %v555 = vmul.f32 %v554, 2.0
  %v556 = vsub.f32 %v555, 1.0
  %v557 = vmul.f32 %v552, %v442
  %v558 = vmul.f32 %v552, %v556
  %560 = vrot.lane.b32.xlu0 %v558, 64
  %v561 = vpop.permute.xlu0 %560
  %v563 = vadd.f32 %v557, %v561
  %v564 = vtanh.pop %v563
  %v565 = vmul.f32 %v554, %v564
  %567 = vrot.lane.b32.xlu0 %v565, 64
  %v568 = vpop.permute.xlu0 %567
  %570 = vst.msk [vmem:[#allocation3 + $0x10] sm:$0xff] %vm224, %v568
  %v571 = vld [vmem:[#allocation2 + $0x30] sm:$0xff]
  %v572 = vld [vmem:[#allocation2 + $0x38] sm:$0xff]
  %v573 = vld [vmem:[%s2] sm:$0xff]
  %v574 = vld [vmem:[%s2 + $0x8] sm:$0xff]
  %v575 = vld [vmem:[%s2 + $0x10] sm:$0xff]
  %v576 = vld [vmem:[%s2 + $0x18] sm:$0xff]
  %v577 = vld [vmem:[%s2 + $0x20] sm:$0xff]
  %v578 = vld [vmem:[%s2 + $0x28] sm:$0xff]
  %v579 = vld [vmem:[%s2 + $0x30] sm:$0xff]
  %v580 = vld [vmem:[%s2 + $0x38] sm:$0xff]
  %v581 = vld [vmem:[%s2 + $0x40] sm:$0xff]
  %v582 = vld [vmem:[%s2 + $0x48] sm:$0xff]
  %v583 = vld [vmem:[%s2 + $0x50] sm:$0xff]
  %v584 = vld [vmem:[%s2 + $0x58] sm:$0xff]
  %v585 = vld [vmem:[%s2 + $0x60] sm:$0xff]
  %v586 = vld [vmem:[%s2 + $0x68] sm:$0xff]
  %v587 = vld [vmem:[%s2 + $0x70] sm:$0xff]
  %v588 = vld [vmem:[%s2 + $0x78] sm:$0xff]
  %v589 = vsel %vm224, %v568, 0
  %591 = vmatprep.subr.mxu0 %v574
  %592 = vmatpush1.msra.mxu0 %v573
  %593 = vmatprep.subr.mxu0 %v576
  %594 = vmatpush1.msra.mxu0 %v575
  %595 = vmatprep.subr.mxu0 %v578
  %596 = vmatpush1.msra.mxu0 %v577
  %597 = vmatprep.subr.mxu0 %v580
  %598 = vmatpush1.msra.mxu0 %v579
  %599 = vmatprep.subr.mxu0 %v582
  %600 = vmatpush1.msra.mxu0 %v581
  %601 = vmatprep.subr.mxu0 %v584
  %602 = vmatpush1.msra.mxu0 %v583
  %603 = vmatprep.subr.mxu0 %v586
  %604 = vmatpush1.msra.mxu0 %v585
  %605 = vmatprep.subr.mxu0 %v588
  %606 = vmatpush1.msra.mxu0 %v587
  %607 = vmatprep.subr.mxu0 0.0
  %608 = vmatpush1.msra.mxu0 0.0
  %609 = vmatprep.subr.mxu0 0.0
  %610 = vmatpush1.msra.mxu0 0.0
  %611 = vmatprep.subr.mxu0 0.0
  %612 = vmatpush1.msra.mxu0 0.0
  %613 = vmatprep.subr.mxu0 0.0
  %614 = vmatpush1.msra.mxu0 0.0
  %615 = vmatprep.subr.mxu0 0.0
  %616 = vmatpush1.msra.mxu0 0.0
  %617 = vmatprep.subr.mxu0 0.0
  %618 = vmatpush1.msra.mxu0 0.0
  %619 = vmatprep.subr.mxu0 0.0
  %620 = vmatpush1.msra.mxu0 0.0
  %621 = vmatprep.subr.mxu0 0.0
  %622 = vmatpush1.msra.mxu0 0.0
  %623 = vmatprep.subr.mxu0 0.0
  %624 = vmatpush1.msra.mxu0 0.0
  %625 = vmatprep.subr.mxu0 0.0
  %626 = vmatpush1.msra.mxu0 0.0
  %627 = vmatprep.subr.mxu0 0.0
  %628 = vmatpush1.msra.mxu0 0.0
  %629 = vmatprep.subr.mxu0 0.0
  %630 = vmatpush1.msra.mxu0 0.0
  %631 = vmatprep.subr.mxu0 0.0
  %632 = vmatpush1.msra.mxu0 0.0
  %633 = vmatprep.subr.mxu0 0.0
  %634 = vmatpush1.msra.mxu0 0.0
  %635 = vmatprep.subr.mxu0 0.0
  %636 = vmatpush1.msra.mxu0 0.0
  %637 = vmatprep.subr.mxu0 0.0
  %638 = vmatpush1.msra.mxu0 0.0
  %639 = vmatprep.subr.mxu0 0.0
  %640 = vmatpush1.msra.mxu0 0.0
  %641 = vmatprep.subr.mxu0 0.0
  %642 = vmatpush1.msra.mxu0 0.0
  %643 = vmatprep.subr.mxu0 0.0
  %644 = vmatpush1.msra.mxu0 0.0
  %645 = vmatprep.subr.mxu0 0.0
  %646 = vmatpush1.msra.mxu0 0.0
  %647 = vmatprep.subr.mxu0 0.0
  %648 = vmatpush1.msra.mxu0 0.0
  %649 = vmatprep.subr.mxu0 0.0
  %650 = vmatpush1.msra.mxu0 0.0
  %651 = vmatprep.subr.mxu0 0.0
  %652 = vmatpush1.msra.mxu0 0.0
  %653 = vmatprep.subr.mxu0 0.0
  %654 = vmatpush1.msra.mxu0 0.0
  %655 = vmatprep.mubr.f32.mxu0 0.0
  %656 = vmatmul.mubr.f32.gmra.mrb[0].mxu0 %v589
  %v657 = vpop.f32.mrb[0].mxu0
  %v658 = vadd.f32 0.0, %v657
  %v659 = vpop.f32.mrb[0].mxu0
  %v660 = vadd.f32 0.0, %v659
  %661 = vdwg.mxu0
  %v662 = vadd.f32 %v571, %v658
  %v663 = vadd.f32 %v572, %v660
  %v664 = vxor.u32 %v662, 2147483648
  %v665 = vxor.u32 %v663, 2147483648
  %v666 = vmul.f32 %v664, 1.442695
  %v667 = vpow.pop %v666
  %v668 = vmul.f32 %v665, 1.442695
  %v669 = vpow.pop %v668
  %v670 = vadd.f32 %v667, 1.0
  %v671 = vadd.f32 %v669, 1.0
  %v672 = vrcp.pop %v670
  %v673 = vmul.f32 1.0, %v672
  %v674 = vrcp.pop %v671
  %v675 = vmul.f32 1.0, %v674
  %v676 = vmul.f32 %v675, 2.0
  %v677 = vsub.f32 %v676, 1.0
  %v678 = vmul.f32 %v673, %v563
  %v679 = vmul.f32 %v673, %v677
  %681 = vrot.lane.b32.xlu0 %v679, 64
  %v682 = vpop.permute.xlu0 %681
  %v684 = vadd.f32 %v678, %v682
  %v685 = vtanh.pop %v684
  %v686 = vmul.f32 %v675, %v685
  %688 = vrot.lane.b32.xlu0 %v686, 64
  %v689 = vpop.permute.xlu0 %688
  %691 = vst.msk [vmem:[#allocation3 + $0x18] sm:$0xff] %vm224, %v689
  %v692 = vld [vmem:[#allocation2 + $0x40] sm:$0xff]
  %v693 = vld [vmem:[#allocation2 + $0x48] sm:$0xff]
  %v694 = vld [vmem:[%s2] sm:$0xff]
  %v695 = vld [vmem:[%s2 + $0x8] sm:$0xff]
  %v696 = vld [vmem:[%s2 + $0x10] sm:$0xff]
  %v697 = vld [vmem:[%s2 + $0x18] sm:$0xff]
  %v698 = vld [vmem:[%s2 + $0x20] sm:$0xff]
  %v699 = vld [vmem:[%s2 + $0x28] sm:$0xff]
  %v700 = vld [vmem:[%s2 + $0x30] sm:$0xff]
  %v701 = vld [vmem:[%s2 + $0x38] sm:$0xff]
  %v702 = vld [vmem:[%s2 + $0x40] sm:$0xff]
  %v703 = vld [vmem:[%s2 + $0x48] sm:$0xff]
  %v704 = vld [vmem:[%s2 + $0x50] sm:$0xff]
  %v705 = vld [vmem:[%s2 + $0x58] sm:$0xff]
  %v706 = vld [vmem:[%s2 + $0x60] sm:$0xff]
  %v707 = vld [vmem:[%s2 + $0x68] sm:$0xff]
  %v708 = vld [vmem:[%s2 + $0x70] sm:$0xff]
  %v709 = vld [vmem:[%s2 + $0x78] sm:$0xff]
  %v710 = vsel %vm224, %v689, 0
  %712 = vmatprep.subr.mxu0 %v695
  %713 = vmatpush1.msra.mxu0 %v694
  %714 = vmatprep.subr.mxu0 %v697
  %715 = vmatpush1.msra.mxu0 %v696
  %716 = vmatprep.subr.mxu0 %v699
  %717 = vmatpush1.msra.mxu0 %v698
  %718 = vmatprep.subr.mxu0 %v701
  %719 = vmatpush1.msra.mxu0 %v700
  %720 = vmatprep.subr.mxu0 %v703
  %721 = vmatpush1.msra.mxu0 %v702
  %722 = vmatprep.subr.mxu0 %v705
  %723 = vmatpush1.msra.mxu0 %v704
  %724 = vmatprep.subr.mxu0 %v707
  %725 = vmatpush1.msra.mxu0 %v706
  %726 = vmatprep.subr.mxu0 %v709
  %727 = vmatpush1.msra.mxu0 %v708
  %728 = vmatprep.subr.mxu0 0.0
  %729 = vmatpush1.msra.mxu0 0.0
  %730 = vmatprep.subr.mxu0 0.0
  %731 = vmatpush1.msra.mxu0 0.0
  %732 = vmatprep.subr.mxu0 0.0
  %733 = vmatpush1.msra.mxu0 0.0
  %734 = vmatprep.subr.mxu0 0.0
  %735 = vmatpush1.msra.mxu0 0.0
  %736 = vmatprep.subr.mxu0 0.0
  %737 = vmatpush1.msra.mxu0 0.0
  %738 = vmatprep.subr.mxu0 0.0
  %739 = vmatpush1.msra.mxu0 0.0
  %740 = vmatprep.subr.mxu0 0.0
  %741 = vmatpush1.msra.mxu0 0.0
  %742 = vmatprep.subr.mxu0 0.0
  %743 = vmatpush1.msra.mxu0 0.0
  %744 = vmatprep.subr.mxu0 0.0
  %745 = vmatpush1.msra.mxu0 0.0
  %746 = vmatprep.subr.mxu0 0.0
  %747 = vmatpush1.msra.mxu0 0.0
  %748 = vmatprep.subr.mxu0 0.0
  %749 = vmatpush1.msra.mxu0 0.0
  %750 = vmatprep.subr.mxu0 0.0
  %751 = vmatpush1.msra.mxu0 0.0
  %752 = vmatprep.subr.mxu0 0.0
  %753 = vmatpush1.msra.mxu0 0.0
  %754 = vmatprep.subr.mxu0 0.0
  %755 = vmatpush1.msra.mxu0 0.0
  %756 = vmatprep.subr.mxu0 0.0
  %757 = vmatpush1.msra.mxu0 0.0
  %758 = vmatprep.subr.mxu0 0.0
  %759 = vmatpush1.msra.mxu0 0.0
  %760 = vmatprep.subr.mxu0 0.0
  %761 = vmatpush1.msra.mxu0 0.0
  %762 = vmatprep.subr.mxu0 0.0
  %763 = vmatpush1.msra.mxu0 0.0
  %764 = vmatprep.subr.mxu0 0.0
  %765 = vmatpush1.msra.mxu0 0.0
  %766 = vmatprep.subr.mxu0 0.0
  %767 = vmatpush1.msra.mxu0 0.0
  %768 = vmatprep.subr.mxu0 0.0
  %769 = vmatpush1.msra.mxu0 0.0
  %770 = vmatprep.subr.mxu0 0.0
  %771 = vmatpush1.msra.mxu0 0.0
  %772 = vmatprep.subr.mxu0 0.0
  %773 = vmatpush1.msra.mxu0 0.0
  %774 = vmatprep.subr.mxu0 0.0
  %775 = vmatpush1.msra.mxu0 0.0
  %776 = vmatprep.mubr.f32.mxu0 0.0
  %777 = vmatmul.mubr.f32.gmra.mrb[0].mxu0 %v710
  %v778 = vpop.f32.mrb[0].mxu0
  %v779 = vadd.f32 0.0, %v778
  %v780 = vpop.f32.mrb[0].mxu0
  %v781 = vadd.f32 0.0, %v780
  %782 = vdwg.mxu0
  %v783 = vadd.f32 %v692, %v779
  %v784 = vadd.f32 %v693, %v781
  %v785 = vxor.u32 %v783, 2147483648
  %v786 = vxor.u32 %v784, 2147483648
  %v787 = vmul.f32 %v785, 1.442695
  %v788 = vpow.pop %v787
  %v789 = vmul.f32 %v786, 1.442695
  %v790 = vpow.pop %v789
  %v791 = vadd.f32 %v788, 1.0
  %v792 = vadd.f32 %v790, 1.0
  %v793 = vrcp.pop %v791
  %v794 = vmul.f32 1.0, %v793
  %v795 = vrcp.pop %v792
  %v796 = vmul.f32 1.0, %v795
  %v797 = vmul.f32 %v796, 2.0
  %v798 = vsub.f32 %v797, 1.0
  %v799 = vmul.f32 %v794, %v684
  %v800 = vmul.f32 %v794, %v798
  %802 = vrot.lane.b32.xlu0 %v800, 64
  %v803 = vpop.permute.xlu0 %802
  %v805 = vadd.f32 %v799, %v803
  %v806 = vtanh.pop %v805
  %v807 = vmul.f32 %v796, %v806
  %809 = vrot.lane.b32.xlu0 %v807, 64
  %v810 = vpop.permute.xlu0 %809
  %812 = vst.msk [vmem:[#allocation3 + $0x20] sm:$0xff] %vm224, %v810
  %v813 = vld [vmem:[#allocation2 + $0x50] sm:$0xff]
  %v814 = vld [vmem:[#allocation2 + $0x58] sm:$0xff]
  %v815 = vld [vmem:[%s2] sm:$0xff]
  %v816 = vld [vmem:[%s2 + $0x8] sm:$0xff]
  %v817 = vld [vmem:[%s2 + $0x10] sm:$0xff]
  %v818 = vld [vmem:[%s2 + $0x18] sm:$0xff]
  %v819 = vld [vmem:[%s2 + $0x20] sm:$0xff]
  %v820 = vld [vmem:[%s2 + $0x28] sm:$0xff]
  %v821 = vld [vmem:[%s2 + $0x30] sm:$0xff]
  %v822 = vld [vmem:[%s2 + $0x38] sm:$0xff]
  %v823 = vld [vmem:[%s2 + $0x40] sm:$0xff]
  %v824 = vld [vmem:[%s2 + $0x48] sm:$0xff]
  %v825 = vld [vmem:[%s2 + $0x50] sm:$0xff]
  %v826 = vld [vmem:[%s2 + $0x58] sm:$0xff]
  %v827 = vld [vmem:[%s2 + $0x60] sm:$0xff]
  %v828 = vld [vmem:[%s2 + $0x68] sm:$0xff]
  %v829 = vld [vmem:[%s2 + $0x70] sm:$0xff]
  %v830 = vld [vmem:[%s2 + $0x78] sm:$0xff]
  %v831 = vsel %vm224, %v810, 0
  %833 = vmatprep.subr.mxu0 %v816
  %834 = vmatpush1.msra.mxu0 %v815
  %835 = vmatprep.subr.mxu0 %v818
  %836 = vmatpush1.msra.mxu0 %v817
  %837 = vmatprep.subr.mxu0 %v820
  %838 = vmatpush1.msra.mxu0 %v819
  %839 = vmatprep.subr.mxu0 %v822
  %840 = vmatpush1.msra.mxu0 %v821
  %841 = vmatprep.subr.mxu0 %v824
  %842 = vmatpush1.msra.mxu0 %v823
  %843 = vmatprep.subr.mxu0 %v826
  %844 = vmatpush1.msra.mxu0 %v825
  %845 = vmatprep.subr.mxu0 %v828
  %846 = vmatpush1.msra.mxu0 %v827
  %847 = vmatprep.subr.mxu0 %v830
  %848 = vmatpush1.msra.mxu0 %v829
  %849 = vmatprep.subr.mxu0 0.0
  %850 = vmatpush1.msra.mxu0 0.0
  %851 = vmatprep.subr.mxu0 0.0
  %852 = vmatpush1.msra.mxu0 0.0
  %853 = vmatprep.subr.mxu0 0.0
  %854 = vmatpush1.msra.mxu0 0.0
  %855 = vmatprep.subr.mxu0 0.0
  %856 = vmatpush1.msra.mxu0 0.0
  %857 = vmatprep.subr.mxu0 0.0
  %858 = vmatpush1.msra.mxu0 0.0
  %859 = vmatprep.subr.mxu0 0.0
  %860 = vmatpush1.msra.mxu0 0.0
  %861 = vmatprep.subr.mxu0 0.0
  %862 = vmatpush1.msra.mxu0 0.0
  %863 = vmatprep.subr.mxu0 0.0
  %864 = vmatpush1.msra.mxu0 0.0
  %865 = vmatprep.subr.mxu0 0.0
  %866 = vmatpush1.msra.mxu0 0.0
  %867 = vmatprep.subr.mxu0 0.0
  %868 = vmatpush1.msra.mxu0 0.0
  %869 = vmatprep.subr.mxu0 0.0
  %870 = vmatpush1.msra.mxu0 0.0
  %871 = vmatprep.subr.mxu0 0.0
  %872 = vmatpush1.msra.mxu0 0.0
  %873 = vmatprep.subr.mxu0 0.0
  %874 = vmatpush1.msra.mxu0 0.0
  %875 = vmatprep.subr.mxu0 0.0
  %876 = vmatpush1.msra.mxu0 0.0
  %877 = vmatprep.subr.mxu0 0.0
  %878 = vmatpush1.msra.mxu0 0.0
  %879 = vmatprep.subr.mxu0 0.0
  %880 = vmatpush1.msra.mxu0 0.0
  %881 = vmatprep.subr.mxu0 0.0
  %882 = vmatpush1.msra.mxu0 0.0
  %883 = vmatprep.subr.mxu0 0.0
  %884 = vmatpush1.msra.mxu0 0.0
  %885 = vmatprep.subr.mxu0 0.0
  %886 = vmatpush1.msra.mxu0 0.0
  %887 = vmatprep.subr.mxu0 0.0
  %888 = vmatpush1.msra.mxu0 0.0
  %889 = vmatprep.subr.mxu0 0.0
  %890 = vmatpush1.msra.mxu0 0.0
  %891 = vmatprep.subr.mxu0 0.0
  %892 = vmatpush1.msra.mxu0 0.0
  %893 = vmatprep.subr.mxu0 0.0
  %894 = vmatpush1.msra.mxu0 0.0
  %895 = vmatprep.subr.mxu0 0.0
  %896 = vmatpush1.msra.mxu0 0.0
  %897 = vmatprep.mubr.f32.mxu0 0.0
  %898 = vmatmul.mubr.f32.gmra.mrb[0].mxu0 %v831
  %v899 = vpop.f32.mrb[0].mxu0
  %v900 = vadd.f32 0.0, %v899
  %v901 = vpop.f32.mrb[0].mxu0
  %v902 = vadd.f32 0.0, %v901
  %903 = vdwg.mxu0
  %v904 = vadd.f32 %v813, %v900
  %v905 = vadd.f32 %v814, %v902
  %v906 = vxor.u32 %v904, 2147483648
  %v907 = vxor.u32 %v905, 2147483648
  %v908 = vmul.f32 %v906, 1.442695
  %v909 = vpow.pop %v908
  %v910 = vmul.f32 %v907, 1.442695
  %v911 = vpow.pop %v910
  %v912 = vadd.f32 %v909, 1.0
  %v913 = vadd.f32 %v911, 1.0
  %v914 = vrcp.pop %v912
  %v915 = vmul.f32 1.0, %v914
  %v916 = vrcp.pop %v913
  %v917 = vmul.f32 1.0, %v916
  %v918 = vmul.f32 %v917, 2.0
  %v919 = vsub.f32 %v918, 1.0
  %v920 = vmul.f32 %v915, %v805
  %v921 = vmul.f32 %v915, %v919
  %923 = vrot.lane.b32.xlu0 %v921, 64
  %v924 = vpop.permute.xlu0 %923
  %v926 = vadd.f32 %v920, %v924
  %v927 = vtanh.pop %v926
  %v928 = vmul.f32 %v917, %v927
  %930 = vrot.lane.b32.xlu0 %v928, 64
  %v931 = vpop.permute.xlu0 %930
  %933 = vst.msk [vmem:[#allocation3 + $0x28] sm:$0xff] %vm224, %v931
  %v934 = vld [vmem:[#allocation2 + $0x60] sm:$0xff]
  %v935 = vld [vmem:[#allocation2 + $0x68] sm:$0xff]
  %v936 = vld [vmem:[%s2] sm:$0xff]
  %v937 = vld [vmem:[%s2 + $0x8] sm:$0xff]
  %v938 = vld [vmem:[%s2 + $0x10] sm:$0xff]
  %v939 = vld [vmem:[%s2 + $0x18] sm:$0xff]
  %v940 = vld [vmem:[%s2 + $0x20] sm:$0xff]
  %v941 = vld [vmem:[%s2 + $0x28] sm:$0xff]
  %v942 = vld [vmem:[%s2 + $0x30] sm:$0xff]
  %v943 = vld [vmem:[%s2 + $0x38] sm:$0xff]
  %v944 = vld [vmem:[%s2 + $0x40] sm:$0xff]
  %v945 = vld [vmem:[%s2 + $0x48] sm:$0xff]
  %v946 = vld [vmem:[%s2 + $0x50] sm:$0xff]
  %v947 = vld [vmem:[%s2 + $0x58] sm:$0xff]
  %v948 = vld [vmem:[%s2 + $0x60] sm:$0xff]
  %v949 = vld [vmem:[%s2 + $0x68] sm:$0xff]
  %v950 = vld [vmem:[%s2 + $0x70] sm:$0xff]
  %v951 = vld [vmem:[%s2 + $0x78] sm:$0xff]
  %v952 = vsel %vm224, %v931, 0
  %954 = vmatprep.subr.mxu0 %v937
  %955 = vmatpush1.msra.mxu0 %v936
  %956 = vmatprep.subr.mxu0 %v939
  %957 = vmatpush1.msra.mxu0 %v938
  %958 = vmatprep.subr.mxu0 %v941
  %959 = vmatpush1.msra.mxu0 %v940
  %960 = vmatprep.subr.mxu0 %v943
  %961 = vmatpush1.msra.mxu0 %v942
  %962 = vmatprep.subr.mxu0 %v945
  %963 = vmatpush1.msra.mxu0 %v944
  %964 = vmatprep.subr.mxu0 %v947
  %965 = vmatpush1.msra.mxu0 %v946
  %966 = vmatprep.subr.mxu0 %v949
  %967 = vmatpush1.msra.mxu0 %v948
  %968 = vmatprep.subr.mxu0 %v951
  %969 = vmatpush1.msra.mxu0 %v950
  %970 = vmatprep.subr.mxu0 0.0
  %971 = vmatpush1.msra.mxu0 0.0
  %972 = vmatprep.subr.mxu0 0.0
  %973 = vmatpush1.msra.mxu0 0.0
  %974 = vmatprep.subr.mxu0 0.0
  %975 = vmatpush1.msra.mxu0 0.0
  %976 = vmatprep.subr.mxu0 0.0
  %977 = vmatpush1.msra.mxu0 0.0
  %978 = vmatprep.subr.mxu0 0.0
  %979 = vmatpush1.msra.mxu0 0.0
  %980 = vmatprep.subr.mxu0 0.0
  %981 = vmatpush1.msra.mxu0 0.0
  %982 = vmatprep.subr.mxu0 0.0
  %983 = vmatpush1.msra.mxu0 0.0
  %984 = vmatprep.subr.mxu0 0.0
  %985 = vmatpush1.msra.mxu0 0.0
  %986 = vmatprep.subr.mxu0 0.0
  %987 = vmatpush1.msra.mxu0 0.0
  %988 = vmatprep.subr.mxu0 0.0
  %989 = vmatpush1.msra.mxu0 0.0
  %990 = vmatprep.subr.mxu0 0.0
  %991 = vmatpush1.msra.mxu0 0.0
  %992 = vmatprep.subr.mxu0 0.0
  %993 = vmatpush1.msra.mxu0 0.0
  %994 = vmatprep.subr.mxu0 0.0
  %995 = vmatpush1.msra.mxu0 0.0
  %996 = vmatprep.subr.mxu0 0.0
  %997 = vmatpush1.msra.mxu0 0.0
  %998 = vmatprep.subr.mxu0 0.0
  %999 = vmatpush1.msra.mxu0 0.0
  %1000 = vmatprep.subr.mxu0 0.0
  %1001 = vmatpush1.msra.mxu0 0.0
  %1002 = vmatprep.subr.mxu0 0.0
  %1003 = vmatpush1.msra.mxu0 0.0
  %1004 = vmatprep.subr.mxu0 0.0
  %1005 = vmatpush1.msra.mxu0 0.0
  %1006 = vmatprep.subr.mxu0 0.0
  %1007 = vmatpush1.msra.mxu0 0.0
  %1008 = vmatprep.subr.mxu0 0.0
  %1009 = vmatpush1.msra.mxu0 0.0
  %1010 = vmatprep.subr.mxu0 0.0
  %1011 = vmatpush1.msra.mxu0 0.0
  %1012 = vmatprep.subr.mxu0 0.0
  %1013 = vmatpush1.msra.mxu0 0.0
  %1014 = vmatprep.subr.mxu0 0.0
  %1015 = vmatpush1.msra.mxu0 0.0
  %1016 = vmatprep.subr.mxu0 0.0
  %1017 = vmatpush1.msra.mxu0 0.0
  %1018 = vmatprep.mubr.f32.mxu0 0.0
  %1019 = vmatmul.mubr.f32.gmra.mrb[0].mxu0 %v952
  %v1020 = vpop.f32.mrb[0].mxu0
  %v1021 = vadd.f32 0.0, %v1020
  %v1022 = vpop.f32.mrb[0].mxu0
  %v1023 = vadd.f32 0.0, %v1022
  %1024 = vdwg.mxu0
  %v1025 = vadd.f32 %v934, %v1021
  %v1026 = vadd.f32 %v935, %v1023
  %v1027 = vxor.u32 %v1025, 2147483648
  %v1028 = vxor.u32 %v1026, 2147483648
  %v1029 = vmul.f32 %v1027, 1.442695
  %v1030 = vpow.pop %v1029
  %v1031 = vmul.f32 %v1028, 1.442695
  %v1032 = vpow.pop %v1031
  %v1033 = vadd.f32 %v1030, 1.0
  %v1034 = vadd.f32 %v1032, 1.0
  %v1035 = vrcp.pop %v1033
  %v1036 = vmul.f32 1.0, %v1035
  %v1037 = vrcp.pop %v1034
  %v1038 = vmul.f32 1.0, %v1037
  %v1039 = vmul.f32 %v1038, 2.0
  %v1040 = vsub.f32 %v1039, 1.0
  %v1041 = vmul.f32 %v1036, %v926
  %v1042 = vmul.f32 %v1036, %v1040
  %1044 = vrot.lane.b32.xlu0 %v1042, 64
  %v1045 = vpop.permute.xlu0 %1044
  %v1047 = vadd.f32 %v1041, %v1045
  %v1048 = vtanh.pop %v1047
  %v1049 = vmul.f32 %v1038, %v1048
  %1051 = vrot.lane.b32.xlu0 %v1049, 64
  %v1052 = vpop.permute.xlu0 %1051
  %1054 = vst.msk [vmem:[#allocation3 + $0x30] sm:$0xff] %vm224, %v1052
  %v1055 = vld [vmem:[#allocation2 + $0x70] sm:$0xff]
  %v1056 = vld [vmem:[#allocation2 + $0x78] sm:$0xff]
  %v1057 = vld [vmem:[%s2] sm:$0xff]
  %v1058 = vld [vmem:[%s2 + $0x8] sm:$0xff]
  %v1059 = vld [vmem:[%s2 + $0x10] sm:$0xff]
  %v1060 = vld [vmem:[%s2 + $0x18] sm:$0xff]
  %v1061 = vld [vmem:[%s2 + $0x20] sm:$0xff]
  %v1062 = vld [vmem:[%s2 + $0x28] sm:$0xff]
  %v1063 = vld [vmem:[%s2 + $0x30] sm:$0xff]
  %v1064 = vld [vmem:[%s2 + $0x38] sm:$0xff]
  %v1065 = vld [vmem:[%s2 + $0x40] sm:$0xff]
  %v1066 = vld [vmem:[%s2 + $0x48] sm:$0xff]
  %v1067 = vld [vmem:[%s2 + $0x50] sm:$0xff]
  %v1068 = vld [vmem:[%s2 + $0x58] sm:$0xff]
  %v1069 = vld [vmem:[%s2 + $0x60] sm:$0xff]
  %v1070 = vld [vmem:[%s2 + $0x68] sm:$0xff]
  %v1071 = vld [vmem:[%s2 + $0x70] sm:$0xff]
  %v1072 = vld [vmem:[%s2 + $0x78] sm:$0xff]
  %v1073 = vsel %vm224, %v1052, 0
  %1075 = vmatprep.subr.mxu0 %v1058
  %1076 = vmatpush1.msra.mxu0 %v1057
  %1077 = vmatprep.subr.mxu0 %v1060
  %1078 = vmatpush1.msra.mxu0 %v1059
  %1079 = vmatprep.subr.mxu0 %v1062
  %1080 = vmatpush1.msra.mxu0 %v1061
  %1081 = vmatprep.subr.mxu0 %v1064
  %1082 = vmatpush1.msra.mxu0 %v1063
  %1083 = vmatprep.subr.mxu0 %v1066
  %1084 = vmatpush1.msra.mxu0 %v1065
  %1085 = vmatprep.subr.mxu0 %v1068
  %1086 = vmatpush1.msra.mxu0 %v1067
  %1087 = vmatprep.subr.mxu0 %v1070
  %1088 = vmatpush1.msra.mxu0 %v1069
  %1089 = vmatprep.subr.mxu0 %v1072
  %1090 = vmatpush1.msra.mxu0 %v1071
  %1091 = vmatprep.subr.mxu0 0.0
  %1092 = vmatpush1.msra.mxu0 0.0
  %1093 = vmatprep.subr.mxu0 0.0
  %1094 = vmatpush1.msra.mxu0 0.0
  %1095 = vmatprep.subr.mxu0 0.0
  %1096 = vmatpush1.msra.mxu0 0.0
  %1097 = vmatprep.subr.mxu0 0.0
  %1098 = vmatpush1.msra.mxu0 0.0
  %1099 = vmatprep.subr.mxu0 0.0
  %1100 = vmatpush1.msra.mxu0 0.0
  %1101 = vmatprep.subr.mxu0 0.0
  %1102 = vmatpush1.msra.mxu0 0.0
  %1103 = vmatprep.subr.mxu0 0.0
  %1104 = vmatpush1.msra.mxu0 0.0
  %1105 = vmatprep.subr.mxu0 0.0
  %1106 = vmatpush1.msra.mxu0 0.0
  %1107 = vmatprep.subr.mxu0 0.0
  %1108 = vmatpush1.msra.mxu0 0.0
  %1109 = vmatprep.subr.mxu0 0.0
  %1110 = vmatpush1.msra.mxu0 0.0
  %1111 = vmatprep.subr.mxu0 0.0
  %1112 = vmatpush1.msra.mxu0 0.0
  %1113 = vmatprep.subr.mxu0 0.0
  %1114 = vmatpush1.msra.mxu0 0.0
  %1115 = vmatprep.subr.mxu0 0.0
  %1116 = vmatpush1.msra.mxu0 0.0
  %1117 = vmatprep.subr.mxu0 0.0
  %1118 = vmatpush1.msra.mxu0 0.0
  %1119 = vmatprep.subr.mxu0 0.0
  %1120 = vmatpush1.msra.mxu0 0.0
  %1121 = vmatprep.subr.mxu0 0.0
  %1122 = vmatpush1.msra.mxu0 0.0
  %1123 = vmatprep.subr.mxu0 0.0
  %1124 = vmatpush1.msra.mxu0 0.0
  %1125 = vmatprep.subr.mxu0 0.0
  %1126 = vmatpush1.msra.mxu0 0.0
  %1127 = vmatprep.subr.mxu0 0.0
  %1128 = vmatpush1.msra.mxu0 0.0
  %1129 = vmatprep.subr.mxu0 0.0
  %1130 = vmatpush1.msra.mxu0 0.0
  %1131 = vmatprep.subr.mxu0 0.0
  %1132 = vmatpush1.msra.mxu0 0.0
  %1133 = vmatprep.subr.mxu0 0.0
  %1134 = vmatpush1.msra.mxu0 0.0
  %1135 = vmatprep.subr.mxu0 0.0
  %1136 = vmatpush1.msra.mxu0 0.0
  %1137 = vmatprep.subr.mxu0 0.0
  %1138 = vmatpush1.msra.mxu0 0.0
  %1139 = vmatprep.mubr.f32.mxu0 0.0
  %1140 = vmatmul.mubr.f32.gmra.mrb[0].mxu0 %v1073
  %v1141 = vpop.f32.mrb[0].mxu0
  %v1142 = vadd.f32 0.0, %v1141
  %v1143 = vpop.f32.mrb[0].mxu0
  %v1144 = vadd.f32 0.0, %v1143
  %1145 = vdwg.mxu0
  %v1146 = vadd.f32 %v1055, %v1142
  %v1147 = vadd.f32 %v1056, %v1144
  %v1148 = vxor.u32 %v1146, 2147483648
  %v1149 = vxor.u32 %v1147, 2147483648
  %v1150 = vmul.f32 %v1148, 1.442695
  %v1151 = vpow.pop %v1150
  %v1152 = vmul.f32 %v1149, 1.442695
  %v1153 = vpow.pop %v1152
  %v1154 = vadd.f32 %v1151, 1.0
  %v1155 = vadd.f32 %v1153, 1.0
  %v1156 = vrcp.pop %v1154
  %v1157 = vmul.f32 1.0, %v1156
  %v1158 = vrcp.pop %v1155
  %v1159 = vmul.f32 1.0, %v1158
  %v1160 = vmul.f32 %v1159, 2.0
  %v1161 = vsub.f32 %v1160, 1.0
  %v1162 = vmul.f32 %v1157, %v1047
  %v1163 = vmul.f32 %v1157, %v1161
  %1165 = vrot.lane.b32.xlu0 %v1163, 64
  %v1166 = vpop.permute.xlu0 %1165
  %v1168 = vadd.f32 %v1162, %v1166
  %v1169 = vtanh.pop %v1168
  %v1170 = vmul.f32 %v1159, %v1169
  %1172 = vrot.lane.b32.xlu0 %v1170, 64
  %v1173 = vpop.permute.xlu0 %1172
  %1175 = vst.msk [vmem:[#allocation3 + $0x38] sm:$0xff] %vm224, %v1173
  %v1176 = vld [vmem:[#allocation3] sm:$0xff]
  %v1177 = vld [vmem:[#allocation3 + $0x8] sm:$0xff]
  %v1178 = vld [vmem:[#allocation3 + $0x10] sm:$0xff]
  %v1179 = vld [vmem:[#allocation3 + $0x18] sm:$0xff]
  %v1180 = vld [vmem:[#allocation3 + $0x20] sm:$0xff]
  %v1181 = vld [vmem:[#allocation3 + $0x28] sm:$0xff]
  %v1182 = vld [vmem:[#allocation3 + $0x30] sm:$0xff]
  %v1183 = vld [vmem:[#allocation3 + $0x38] sm:$0xff]
  %v1184 = vld [vmem:[%s4] sm:$0xff]
  %v1185 = vld [vmem:[%s4 + $0x8] sm:$0xff]
  %v1186 = vld [vmem:[%s4 + $0x10] sm:$0xff]
  %v1187 = vld [vmem:[%s4 + $0x18] sm:$0xff]
  %v1188 = vld [vmem:[%s4 + $0x20] sm:$0xff]
  %v1189 = vld [vmem:[%s4 + $0x28] sm:$0xff]
  %v1190 = vld [vmem:[%s4 + $0x30] sm:$0xff]
  %v1191 = vld [vmem:[%s4 + $0x38] sm:$0xff]
  %v1192 = vld [vmem:[%s5] sm:$0x1]
  %v1194 = vlaneseq
  %v1195 = vshrl.u32 %v1194, 7
  %v1196 = vsub.s32 0, %v1195
  %v1197 = vrot.slane %v1192, %v1196
  %v1200 = vsel %vm224, %v1176, 0
  %v1203 = vsel %vm224, %v1177, 0
  %v1206 = vsel %vm224, %v1178, 0
  %v1209 = vsel %vm224, %v1179, 0
  %v1212 = vsel %vm224, %v1180, 0
  %v1215 = vsel %vm224, %v1181, 0
  %v1218 = vsel %vm224, %v1182, 0
  %v1221 = vsel %vm224, %v1183, 0
  %1223 = vmatprep.subr.mxu0 0.0
  %1224 = vmatpush1.msra.mxu0 %v1184
  %1225 = vmatprep.subr.mxu0 0.0
  %1226 = vmatpush1.msra.mxu0 %v1185
  %1227 = vmatprep.subr.mxu0 0.0
  %1228 = vmatpush1.msra.mxu0 %v1186
  %1229 = vmatprep.subr.mxu0 0.0
  %1230 = vmatpush1.msra.mxu0 %v1187
  %1231 = vmatprep.subr.mxu0 0.0
  %1232 = vmatpush1.msra.mxu0 %v1188
  %1233 = vmatprep.subr.mxu0 0.0
  %1234 = vmatpush1.msra.mxu0 %v1189
  %1235 = vmatprep.subr.mxu0 0.0
  %1236 = vmatpush1.msra.mxu0 %v1190
  %1237 = vmatprep.subr.mxu0 0.0
  %1238 = vmatpush1.msra.mxu0 %v1191
  %1239 = vmatprep.subr.mxu0 0.0
  %1240 = vmatpush1.msra.mxu0 0.0
  %1241 = vmatprep.subr.mxu0 0.0
  %1242 = vmatpush1.msra.mxu0 0.0
  %1243 = vmatprep.subr.mxu0 0.0
  %1244 = vmatpush1.msra.mxu0 0.0
  %1245 = vmatprep.subr.mxu0 0.0
  %1246 = vmatpush1.msra.mxu0 0.0
  %1247 = vmatprep.subr.mxu0 0.0
  %1248 = vmatpush1.msra.mxu0 0.0
  %1249 = vmatprep.subr.mxu0 0.0
  %1250 = vmatpush1.msra.mxu0 0.0
  %1251 = vmatprep.subr.mxu0 0.0
  %1252 = vmatpush1.msra.mxu0 0.0
  %1253 = vmatprep.subr.mxu0 0.0
  %1254 = vmatpush1.msra.mxu0 0.0
  %1255 = vmatprep.subr.mxu0 0.0
  %1256 = vmatpush1.msra.mxu0 0.0
  %1257 = vmatprep.subr.mxu0 0.0
  %1258 = vmatpush1.msra.mxu0 0.0
  %1259 = vmatprep.subr.mxu0 0.0
  %1260 = vmatpush1.msra.mxu0 0.0
  %1261 = vmatprep.subr.mxu0 0.0
  %1262 = vmatpush1.msra.mxu0 0.0
  %1263 = vmatprep.subr.mxu0 0.0
  %1264 = vmatpush1.msra.mxu0 0.0
  %1265 = vmatprep.subr.mxu0 0.0
  %1266 = vmatpush1.msra.mxu0 0.0
  %1267 = vmatprep.subr.mxu0 0.0
  %1268 = vmatpush1.msra.mxu0 0.0
  %1269 = vmatprep.subr.mxu0 0.0
  %1270 = vmatpush1.msra.mxu0 0.0
  %1271 = vmatprep.subr.mxu0 0.0
  %1272 = vmatpush1.msra.mxu0 0.0
  %1273 = vmatprep.subr.mxu0 0.0
  %1274 = vmatpush1.msra.mxu0 0.0
  %1275 = vmatprep.subr.mxu0 0.0
  %1276 = vmatpush1.msra.mxu0 0.0
  %1277 = vmatprep.subr.mxu0 0.0
  %1278 = vmatpush1.msra.mxu0 0.0
  %1279 = vmatprep.subr.mxu0 0.0
  %1280 = vmatpush1.msra.mxu0 0.0
  %1281 = vmatprep.subr.mxu0 0.0
  %1282 = vmatpush1.msra.mxu0 0.0
  %1283 = vmatprep.subr.mxu0 0.0
  %1284 = vmatpush1.msra.mxu0 0.0
  %1285 = vmatprep.subr.mxu0 0.0
  %1286 = vmatpush1.msra.mxu0 0.0
  %1287 = vmatprep.mubr.f32.mxu0 0.0
  %1288 = vmatmul.mubr.f32.gmra.mrb[0].mxu0 %v1200
  %v1289 = vpop.f32.mrb[0].mxu0
  %v1290 = vadd.f32 %v1197, %v1289
  %v1291 = vpop.f32.mrb[0].mxu0
  %1292 = vmatprep.mubr.f32.mxu0 0.0
  %1293 = vmatmul.mubr.f32.gmra.mrb[0].mxu0 %v1203
  %v1294 = vpop.f32.mrb[0].mxu0
  %v1295 = vadd.f32 %v1197, %v1294
  %v1296 = vpop.f32.mrb[0].mxu0
  %1297 = vmatprep.mubr.f32.mxu0 0.0
  %1298 = vmatmul.mubr.f32.gmra.mrb[0].mxu0 %v1206
  %v1299 = vpop.f32.mrb[0].mxu0
  %v1300 = vadd.f32 %v1197, %v1299
  %v1301 = vpop.f32.mrb[0].mxu0
  %1302 = vmatprep.mubr.f32.mxu0 0.0
  %1303 = vmatmul.mubr.f32.gmra.mrb[0].mxu0 %v1209
  %v1304 = vpop.f32.mrb[0].mxu0
  %v1305 = vadd.f32 %v1197, %v1304
  %v1306 = vpop.f32.mrb[0].mxu0
  %1307 = vmatprep.mubr.f32.mxu0 0.0
  %1308 = vmatmul.mubr.f32.gmra.mrb[0].mxu0 %v1212
  %v1309 = vpop.f32.mrb[0].mxu0
  %v1310 = vadd.f32 %v1197, %v1309
  %v1311 = vpop.f32.mrb[0].mxu0
  %1312 = vmatprep.mubr.f32.mxu0 0.0
  %1313 = vmatmul.mubr.f32.gmra.mrb[0].mxu0 %v1215
  %v1314 = vpop.f32.mrb[0].mxu0
  %v1315 = vadd.f32 %v1197, %v1314
  %v1316 = vpop.f32.mrb[0].mxu0
  %1317 = vmatprep.mubr.f32.mxu0 0.0
  %1318 = vmatmul.mubr.f32.gmra.mrb[0].mxu0 %v1218
  %v1319 = vpop.f32.mrb[0].mxu0
  %v1320 = vadd.f32 %v1197, %v1319
  %v1321 = vpop.f32.mrb[0].mxu0
  %1322 = vmatprep.mubr.f32.mxu0 0.0
  %1323 = vmatmul.mubr.f32.gmra.mrb[0].mxu0 %v1221
  %v1324 = vpop.f32.mrb[0].mxu0
  %v1325 = vadd.f32 %v1197, %v1324
  %v1326 = vpop.f32.mrb[0].mxu0
  %1327 = vdwg.mxu0
  %v1328 = vmax.f32 %v1290, 0.0
  %v1329 = vmax.f32 %v1295, 0.0
  %v1330 = vmax.f32 %v1300, 0.0
  %v1331 = vmax.f32 %v1305, 0.0
  %v1332 = vmax.f32 %v1310, 0.0
  %v1333 = vmax.f32 %v1315, 0.0
  %v1334 = vmax.f32 %v1320, 0.0
  %v1335 = vmax.f32 %v1325, 0.0
  %1336 = vst [vmem:[%s6] sm:$0xff] %v1328
  %1337 = vst [vmem:[%s6 + $0x8] sm:$0xff] %v1329
  %1338 = vst [vmem:[%s6 + $0x10] sm:$0xff] %v1330
  %1339 = vst [vmem:[%s6 + $0x18] sm:$0xff] %v1331
  %1340 = vst [vmem:[%s6 + $0x20] sm:$0xff] %v1332
  %1341 = vst [vmem:[%s6 + $0x28] sm:$0xff] %v1333
  %1342 = vst [vmem:[%s6 + $0x30] sm:$0xff] %v1334
  %1343 = vst [vmem:[%s6 + $0x38] sm:$0xff] %v1335
  // Predicated region
  $region26: #{pilas_colas_forward.1} parent=0 // pred_check
    _
  $region27: #{pilas_colas_forward.1} parent=0 // pred_check_branch
    %1345 = sbr.rel (0) target = $region29
  $region28: #{pilas_colas_forward.1} parent=0 // pred_region
    _
  $region29: #{pilas_colas_forward.1} parent=0 // pred_fallthru
    _
  // Predicated region
  $region30: #{pilas_colas_forward.1} parent=0 // pred_check
    _
  $region31: #{pilas_colas_forward.1} parent=0 // pred_check_branch
    %1347 = sbr.rel (0) target = $region33
  $region32: #{pilas_colas_forward.1} parent=0 // pred_region
    _
  $region33: #{pilas_colas_forward.1} parent=0 // pred_fallthru
    _

</llo_original>
